<compile_context>
chip_gen: v5e
topology: v5e:2x2
jax: 0.10.0
libtpu: 0.0.40
codegen_flags: <defaults>
</compile_context>

<pallas_src>
import math

import jax
import jax.numpy as jnp
from jax.experimental import pallas as pl
from jax.experimental.pallas import tpu as pltpu

NUM_BUCKETS = 64      # RelativePositionBias(num_buckets=64, ...)
MAX_DISTANCE = 256    # RelativePositionBias(..., max_distance=256)
R_SCALES = (150, 600, 2400, 10000, 40000)

TARGET_LANES = 8192   # flat (q, k) lanes per grid step (bigger tiles -> fewer steps)
MAX_ROWS = 32         # cap on query rows per step (bounds in-kernel unroll)


def _round_up(x, m):
    return -(-x // m) * m


def _srbias_kernel(psk_ref, psq_ref, emb_ref, out_ref):
    """One grid step == TQ query rows x Sp (padded) key columns, all scales fused."""
    num_scales, Sp = psk_ref.shape          # (5, Sp)      pos[k] // r, padded keys
    H, TL = out_ref.shape                   # (H, TQ * Sp) flat output tile
    TQ = psq_ref.shape[-1]                  # query rows handled this step
    nbuckets = emb_ref.shape[-1]            # 64

    pk = psk_ref[...]                       # (5, Sp)
    pq = psq_ref[0]                         # (5, TQ)  pos[q0 + r] // r for this tile

    # rel[s, r*Sp + k] = pk[s, k] - pq[s, r]   ("memory - context"), built flat so
    # the downstream one-hot / matmul never needs a sublane<->lane relayout.
    rel = jnp.concatenate(
        [pk - pq[:, r:r + 1] for r in range(TQ)], axis=1)        # (5, TL) int32

    # --- T5-style bidirectional bucketing, all 5 scales jointly --------------
    nb = NUM_BUCKETS // 2                   # 32
    max_exact = nb // 2                     # 16
    side = jnp.where(rel > 0, nb, 0).astype(jnp.int32)
    n = jnp.abs(rel)
    n_f = jnp.maximum(n.astype(jnp.float32), 1.0)    # masked where n < max_exact
    val_if_large = max_exact + (
        jnp.log(n_f / max_exact)
        / math.log(MAX_DISTANCE / max_exact)
        * (nb - max_exact)
    ).astype(jnp.int32)
    val_if_large = jnp.minimum(val_if_large, nb - 1)
    buckets = side + jnp.where(n < max_exact, n, val_if_large)   # (5, TL) in [0, 64)

    # --- gather via accumulated one-hot MXU dots (no 320-row intermediate) ---
    iota = jax.lax.broadcasted_iota(jnp.int32, (nbuckets, TL), 0)   # built once
    acc = jnp.zeros((H, TL), jnp.float32)
    for s in range(num_scales):
        table_s = emb_ref[s]                                        # (H, 64)
        onehot = (iota == buckets[s:s + 1, :]).astype(table_s.dtype)  # (64, TL)
        acc = acc + jnp.dot(table_s, onehot,
                            preferred_element_type=jnp.float32)
    out_ref[...] = acc                                              # one dense write


def srbias_forward(pos, emb_tables, *, target_lanes=TARGET_LANES,
                   max_rows=MAX_ROWS, table_dtype=jnp.float32):
    """pos: (S,) integer positions; emb_tables: (5, NUM_BUCKETS, odim) f32.
    Returns (odim, S, S) float32.  Set table_dtype=jnp.bfloat16 on v6e/v7x for
    a faster one-hot/MXU path (slightly looser numerics)."""
    S = pos.shape[0]
    num_scales, nbuckets, H = emb_tables.shape

    pos = pos.astype(jnp.int32)
    # Static-divisor floor division on the (S,) vector (O(S), strength-reduced).
    ps = jnp.stack([pos // int(r) for r in R_SCALES], axis=0)        # (5, S)

    # Key side: pad S up to a lane-dense multiple of 128.
    Sp = _round_up(S, 128)
    ps_k = ps if Sp == S else jnp.pad(ps, ((0, 0), (0, Sp - S)))     # (5, Sp)

    # Query rows per grid step: aim for ~target_lanes flat lanes per step,
    # keep the in-kernel unroll bounded, and keep >= 2 grid steps when S > 1
    # so the parallel axis can shard across v7x's two TensorCores.
    TQ = min(max(target_lanes // Sp, 1), max_rows)
    while TQ > 1 and -(-S // TQ) < 2:
        TQ //= 2
    nq = -(-S // TQ)
    Sq_pad = nq * TQ
    TL = TQ * Sp

    ps_q = ps if Sq_pad == S else jnp.pad(ps, ((0, 0), (0, Sq_pad - S)))
    ps_q = ps_q.reshape(num_scales, nq, TQ).transpose(1, 0, 2)       # (nq, 5, TQ)

    # Tables as (5, H, 64): column b of slab s == emb_tables[s, b, :].
    emb_t = jnp.transpose(emb_tables.astype(table_dtype), (0, 2, 1)) # (5, H, 64)

    out_flat = pl.pallas_call(
        _srbias_kernel,
        out_shape=jax.ShapeDtypeStruct((H, nq * TL), jnp.float32),
        grid_spec=pltpu.PrefetchScalarGridSpec(
            num_scalar_prefetch=0,
            grid=(nq,),
            in_specs=[
                pl.BlockSpec((num_scales, Sp), lambda qi: (0, 0)),        # keys (resident)
                pl.BlockSpec((1, num_scales, TQ), lambda qi: (qi, 0, 0)),  # this tile's queries
                pl.BlockSpec((num_scales, H, nbuckets), lambda qi: (0, 0, 0)),  # tables
            ],
            out_specs=pl.BlockSpec((H, TL), lambda qi: (0, qi)),
        ),
        compiler_params=pltpu.CompilerParams(
            dimension_semantics=("parallel",),          # independent q-row tiles
            vmem_limit_bytes=32 * 1024 * 1024,          # headroom on all generations
        ),
    )(ps_k, ps_q, emb_t)

    # Flat tile layout is row-major over (q, padded-k): free reshape, then crop.
    return out_flat.reshape(H, Sq_pad, Sp)[:, :S, :S]


def srbias_reference(pos, emb_tables):
    """Pure-JAX reference of the same forward (for verification)."""
    pos = pos.astype(jnp.int32)
    out = 0.0
    nb = NUM_BUCKETS // 2
    max_exact = nb // 2
    for i, r in enumerate(R_SCALES):
        p = jnp.floor_divide(pos, r)
        rel = p[None, :] - p[:, None]
        buckets = jnp.where(rel > 0, nb, 0).astype(jnp.int32)
        n = jnp.abs(rel)
        n_f = jnp.maximum(n.astype(jnp.float32), 1.0)
        vil = max_exact + (
            jnp.log(n_f / max_exact) / math.log(MAX_DISTANCE / max_exact) * (nb - max_exact)
        ).astype(jnp.int32)
        vil = jnp.minimum(vil, nb - 1)
        buckets = buckets + jnp.where(n < max_exact, n, vil)
        vals = emb_tables[i][buckets]                       # (S, S, H)
        out = out + jnp.transpose(vals, (2, 0, 1))          # (H, S, S)
    return out


if __name__ == "__main__":
    S = 16          # sequence length (number of positions)
    ODIM = 8        # n_heads / odim

    key = jax.random.PRNGKey(0)
    k_pos, k_emb = jax.random.split(key)
    # deterministic "raw" positions (e.g. sample indices) covering several scales
    pos = jnp.sort(jax.random.randint(k_pos, (S,), 0, 200_000, dtype=jnp.int32))
    # deterministic embedding tables: Embedding(num_buckets=64, n_heads=ODIM) per scale
    emb_tables = 0.02 * jax.random.normal(
        k_emb, (len(R_SCALES), NUM_BUCKETS, ODIM), dtype=jnp.float32)

    out = srbias_forward(pos, emb_tables)
    out = jax.block_until_ready(out)

    ref = srbias_reference(pos, emb_tables)
    assert out.shape == (ODIM, S, S), out.shape
    assert jnp.allclose(out, ref, atol=1e-5, rtol=1e-5), float(jnp.max(jnp.abs(out - ref)))
    print("KERNEL_OK")
</pallas_src>

<mosaic_0001>
module attributes {stable_mosaic.version = 11 : i64} {
  func.func @_srbias_kernel(%arg0: i32, %arg1: memref<5x128xi32, #tpu.memory_space<vmem>>, %arg2: memref<1x5x8xi32, #tpu.memory_space<vmem>>, %arg3: memref<5x8x64xf32, #tpu.memory_space<vmem>>, %arg4: memref<8x1024xf32, #tpu.memory_space<vmem>>) attributes {dimension_semantics = [#tpu.dimension_semantics<parallel>], iteration_bounds = array<i64: 2>, scalar_prefetch = 0 : i64, scratch_operands = 0 : i64, tpu.core_type = #tpu.core_type<tc>, window_params = [{pipeline_mode = #tpu.pipeline_mode<synchronous>, transform_indices = @transform_0, window_bounds = array<i64: 5, 128>}, {transform_indices = @transform_1, window_bounds = array<i64: 1, 5, 8>}, {pipeline_mode = #tpu.pipeline_mode<synchronous>, transform_indices = @transform_2, window_bounds = array<i64: 5, 8, 64>}, {transform_indices = @transform_3, window_bounds = array<i64: 8, 1024>}]} {
    %c0 = arith.constant 0 : index
    %c0_0 = arith.constant 0 : index
    %0 = vector.load %arg1[%c0, %c0_0] : memref<5x128xi32, #tpu.memory_space<vmem>>, vector<5x128xi32>
    %c0_1 = arith.constant 0 : index
    %c0_2 = arith.constant 0 : index
    %c0_3 = arith.constant 0 : index
    %1 = vector.load %arg2[%c0_1, %c0_2, %c0_3] : memref<1x5x8xi32, #tpu.memory_space<vmem>>, vector<1x5x8xi32>
    %2 = vector.shape_cast %1 : vector<1x5x8xi32> to vector<5x8xi32>
    %3 = vector.extract_strided_slice %2 {offsets = [0, 0], sizes = [5, 1], strides = [1, 1]} : vector<5x8xi32> to vector<5x1xi32>
    %4 = vector.broadcast %3 : vector<5x1xi32> to vector<5x128xi32>
    %5 = arith.subi %0, %4 : vector<5x128xi32>
    %6 = vector.extract_strided_slice %2 {offsets = [0, 1], sizes = [5, 1], strides = [1, 1]} : vector<5x8xi32> to vector<5x1xi32>
    %7 = vector.broadcast %6 : vector<5x1xi32> to vector<5x128xi32>
    %8 = arith.subi %0, %7 : vector<5x128xi32>
    %9 = vector.extract_strided_slice %2 {offsets = [0, 2], sizes = [5, 1], strides = [1, 1]} : vector<5x8xi32> to vector<5x1xi32>
    %10 = vector.broadcast %9 : vector<5x1xi32> to vector<5x128xi32>
    %11 = arith.subi %0, %10 : vector<5x128xi32>
    %12 = vector.extract_strided_slice %2 {offsets = [0, 3], sizes = [5, 1], strides = [1, 1]} : vector<5x8xi32> to vector<5x1xi32>
    %13 = vector.broadcast %12 : vector<5x1xi32> to vector<5x128xi32>
    %14 = arith.subi %0, %13 : vector<5x128xi32>
    %15 = vector.extract_strided_slice %2 {offsets = [0, 4], sizes = [5, 1], strides = [1, 1]} : vector<5x8xi32> to vector<5x1xi32>
    %16 = vector.broadcast %15 : vector<5x1xi32> to vector<5x128xi32>
    %17 = arith.subi %0, %16 : vector<5x128xi32>
    %18 = vector.extract_strided_slice %2 {offsets = [0, 5], sizes = [5, 1], strides = [1, 1]} : vector<5x8xi32> to vector<5x1xi32>
    %19 = vector.broadcast %18 : vector<5x1xi32> to vector<5x128xi32>
    %20 = arith.subi %0, %19 : vector<5x128xi32>
    %21 = vector.extract_strided_slice %2 {offsets = [0, 6], sizes = [5, 1], strides = [1, 1]} : vector<5x8xi32> to vector<5x1xi32>
    %22 = vector.broadcast %21 : vector<5x1xi32> to vector<5x128xi32>
    %23 = arith.subi %0, %22 : vector<5x128xi32>
    %24 = vector.extract_strided_slice %2 {offsets = [0, 7], sizes = [5, 1], strides = [1, 1]} : vector<5x8xi32> to vector<5x1xi32>
    %25 = vector.broadcast %24 : vector<5x1xi32> to vector<5x128xi32>
    %26 = arith.subi %0, %25 : vector<5x128xi32>
    %27 = tpu.concatenate %5, %8, %11, %14, %17, %20, %23, %26 in 1 : vector<5x128xi32>, vector<5x128xi32>, vector<5x128xi32>, vector<5x128xi32>, vector<5x128xi32>, vector<5x128xi32>, vector<5x128xi32>, vector<5x128xi32> -> vector<5x1024xi32>
    %c0_i32 = arith.constant 0 : i32
    %28 = vector.broadcast %c0_i32 : i32 to vector<5x1024xi32>
    %29 = arith.cmpi sgt, %27, %28 : vector<5x1024xi32>
    %c32_i32 = arith.constant 32 : i32
    %c0_i32_4 = arith.constant 0 : i32
    %30 = vector.broadcast %c32_i32 : i32 to vector<5x1024xi32>
    %31 = vector.broadcast %c0_i32_4 : i32 to vector<5x1024xi32>
    %32 = arith.select %29, %30, %31 : vector<5x1024xi1>, vector<5x1024xi32>
    %33 = math.absi %27 : vector<5x1024xi32>
    %34 = arith.sitofp %33 : vector<5x1024xi32> to vector<5x1024xf32>
    %cst = arith.constant 1.000000e+00 : f32
    %35 = vector.broadcast %cst : f32 to vector<5x1024xf32>
    %36 = arith.maximumf %34, %35 : vector<5x1024xf32>
    %cst_5 = arith.constant 1.600000e+01 : f32
    %37 = vector.broadcast %cst_5 : f32 to vector<5x1024xf32>
    %38 = arith.divf %36, %37 : vector<5x1024xf32>
    %39 = math.log %38 : vector<5x1024xf32>
    %cst_6 = arith.constant 2.77258873 : f32
    %40 = vector.broadcast %cst_6 : f32 to vector<5x1024xf32>
    %41 = arith.divf %39, %40 : vector<5x1024xf32>
    %cst_7 = arith.constant 1.600000e+01 : f32
    %42 = vector.broadcast %cst_7 : f32 to vector<5x1024xf32>
    %43 = arith.mulf %41, %42 : vector<5x1024xf32>
    %44 = arith.fptosi %43 : vector<5x1024xf32> to vector<5x1024xi32>
    %c16_i32 = arith.constant 16 : i32
    %45 = vector.broadcast %c16_i32 : i32 to vector<5x1024xi32>
    %46 = arith.addi %45, %44 : vector<5x1024xi32>
    %c31_i32 = arith.constant 31 : i32
    %47 = vector.broadcast %c31_i32 : i32 to vector<5x1024xi32>
    %48 = arith.minsi %46, %47 : vector<5x1024xi32>
    %c16_i32_8 = arith.constant 16 : i32
    %49 = vector.broadcast %c16_i32_8 : i32 to vector<5x1024xi32>
    %50 = arith.cmpi slt, %33, %49 : vector<5x1024xi32>
    %51 = arith.select %50, %33, %48 : vector<5x1024xi1>, vector<5x1024xi32>
    %52 = arith.addi %32, %51 : vector<5x1024xi32>
    %53 = tpu.iota {dimensions = array<i32: 0>} : vector<64x1024xi32>
    %cst_9 = arith.constant 0.000000e+00 : f32
    %54 = vector.broadcast %cst_9 : f32 to vector<8x1024xf32>
    %c0_10 = arith.constant 0 : index
    %c0_11 = arith.constant 0 : index
    %c0_12 = arith.constant 0 : index
    %55 = vector.load %arg3[%c0_10, %c0_11, %c0_12] : memref<5x8x64xf32, #tpu.memory_space<vmem>>, vector<1x8x64xf32>
    %56 = vector.shape_cast %55 : vector<1x8x64xf32> to vector<8x64xf32>
    %57 = vector.extract_strided_slice %52 {offsets = [0, 0], sizes = [1, 1024], strides = [1, 1]} : vector<5x1024xi32> to vector<1x1024xi32>
    %58 = vector.broadcast %57 : vector<1x1024xi32> to vector<64x1024xi32>
    %59 = arith.cmpi eq, %53, %58 : vector<64x1024xi32>
    %60 = arith.extui %59 : vector<64x1024xi1> to vector<64x1024xi32>
    %61 = arith.sitofp %60 : vector<64x1024xi32> to vector<64x1024xf32>
    %cst_13 = arith.constant dense<0.000000e+00> : vector<8x1024xf32>
    %62 = tpu.matmul %56, %61, %cst_13 {dimension_numbers = #tpu.dot_dimension_numbers<[1], [0], [0], [1], [0, 0, 1, 1], [], []>} : vector<8x64xf32>, vector<64x1024xf32>, vector<8x1024xf32> -> vector<8x1024xf32>
    %63 = arith.addf %54, %62 : vector<8x1024xf32>
    %c1 = arith.constant 1 : index
    %c0_14 = arith.constant 0 : index
    %c0_15 = arith.constant 0 : index
    %64 = vector.load %arg3[%c1, %c0_14, %c0_15] : memref<5x8x64xf32, #tpu.memory_space<vmem>>, vector<1x8x64xf32>
    %65 = vector.shape_cast %64 : vector<1x8x64xf32> to vector<8x64xf32>
    %66 = vector.extract_strided_slice %52 {offsets = [1, 0], sizes = [1, 1024], strides = [1, 1]} : vector<5x1024xi32> to vector<1x1024xi32>
    %67 = vector.broadcast %66 : vector<1x1024xi32> to vector<64x1024xi32>
    %68 = arith.cmpi eq, %53, %67 : vector<64x1024xi32>
    %69 = arith.extui %68 : vector<64x1024xi1> to vector<64x1024xi32>
    %70 = arith.sitofp %69 : vector<64x1024xi32> to vector<64x1024xf32>
    %cst_16 = arith.constant dense<0.000000e+00> : vector<8x1024xf32>
    %71 = tpu.matmul %65, %70, %cst_16 {dimension_numbers = #tpu.dot_dimension_numbers<[1], [0], [0], [1], [0, 0, 1, 1], [], []>} : vector<8x64xf32>, vector<64x1024xf32>, vector<8x1024xf32> -> vector<8x1024xf32>
    %72 = arith.addf %63, %71 : vector<8x1024xf32>
    %c2 = arith.constant 2 : index
    %c0_17 = arith.constant 0 : index
    %c0_18 = arith.constant 0 : index
    %73 = vector.load %arg3[%c2, %c0_17, %c0_18] : memref<5x8x64xf32, #tpu.memory_space<vmem>>, vector<1x8x64xf32>
    %74 = vector.shape_cast %73 : vector<1x8x64xf32> to vector<8x64xf32>
    %75 = vector.extract_strided_slice %52 {offsets = [2, 0], sizes = [1, 1024], strides = [1, 1]} : vector<5x1024xi32> to vector<1x1024xi32>
    %76 = vector.broadcast %75 : vector<1x1024xi32> to vector<64x1024xi32>
    %77 = arith.cmpi eq, %53, %76 : vector<64x1024xi32>
    %78 = arith.extui %77 : vector<64x1024xi1> to vector<64x1024xi32>
    %79 = arith.sitofp %78 : vector<64x1024xi32> to vector<64x1024xf32>
    %cst_19 = arith.constant dense<0.000000e+00> : vector<8x1024xf32>
    %80 = tpu.matmul %74, %79, %cst_19 {dimension_numbers = #tpu.dot_dimension_numbers<[1], [0], [0], [1], [0, 0, 1, 1], [], []>} : vector<8x64xf32>, vector<64x1024xf32>, vector<8x1024xf32> -> vector<8x1024xf32>
    %81 = arith.addf %72, %80 : vector<8x1024xf32>
    %c3 = arith.constant 3 : index
    %c0_20 = arith.constant 0 : index
    %c0_21 = arith.constant 0 : index
    %82 = vector.load %arg3[%c3, %c0_20, %c0_21] : memref<5x8x64xf32, #tpu.memory_space<vmem>>, vector<1x8x64xf32>
    %83 = vector.shape_cast %82 : vector<1x8x64xf32> to vector<8x64xf32>
    %84 = vector.extract_strided_slice %52 {offsets = [3, 0], sizes = [1, 1024], strides = [1, 1]} : vector<5x1024xi32> to vector<1x1024xi32>
    %85 = vector.broadcast %84 : vector<1x1024xi32> to vector<64x1024xi32>
    %86 = arith.cmpi eq, %53, %85 : vector<64x1024xi32>
    %87 = arith.extui %86 : vector<64x1024xi1> to vector<64x1024xi32>
    %88 = arith.sitofp %87 : vector<64x1024xi32> to vector<64x1024xf32>
    %cst_22 = arith.constant dense<0.000000e+00> : vector<8x1024xf32>
    %89 = tpu.matmul %83, %88, %cst_22 {dimension_numbers = #tpu.dot_dimension_numbers<[1], [0], [0], [1], [0, 0, 1, 1], [], []>} : vector<8x64xf32>, vector<64x1024xf32>, vector<8x1024xf32> -> vector<8x1024xf32>
    %90 = arith.addf %81, %89 : vector<8x1024xf32>
    %c4 = arith.constant 4 : index
    %c0_23 = arith.constant 0 : index
    %c0_24 = arith.constant 0 : index
    %91 = vector.load %arg3[%c4, %c0_23, %c0_24] : memref<5x8x64xf32, #tpu.memory_space<vmem>>, vector<1x8x64xf32>
    %92 = vector.shape_cast %91 : vector<1x8x64xf32> to vector<8x64xf32>
    %93 = vector.extract_strided_slice %52 {offsets = [4, 0], sizes = [1, 1024], strides = [1, 1]} : vector<5x1024xi32> to vector<1x1024xi32>
    %94 = vector.broadcast %93 : vector<1x1024xi32> to vector<64x1024xi32>
    %95 = arith.cmpi eq, %53, %94 : vector<64x1024xi32>
    %96 = arith.extui %95 : vector<64x1024xi1> to vector<64x1024xi32>
    %97 = arith.sitofp %96 : vector<64x1024xi32> to vector<64x1024xf32>
    %cst_25 = arith.constant dense<0.000000e+00> : vector<8x1024xf32>
    %98 = tpu.matmul %92, %97, %cst_25 {dimension_numbers = #tpu.dot_dimension_numbers<[1], [0], [0], [1], [0, 0, 1, 1], [], []>} : vector<8x64xf32>, vector<64x1024xf32>, vector<8x1024xf32> -> vector<8x1024xf32>
    %99 = arith.addf %90, %98 : vector<8x1024xf32>
    %c0_26 = arith.constant 0 : index
    %c0_27 = arith.constant 0 : index
    %100 = vector.load %arg4[%c0_26, %c0_27] : memref<8x1024xf32, #tpu.memory_space<vmem>>, vector<8x1024xf32>
    tpu.vector_store %arg4[%c0_26, %c0_27], %99 {strides = array<i32>} : memref<8x1024xf32, #tpu.memory_space<vmem>>, vector<8x1024xf32>,
    return
  }
  func.func @transform_0(%arg0: i32) -> (i32, i32) {
    %c0_i32 = arith.constant 0 : i32
    %c0_i32_0 = arith.constant 0 : i32
    %c0_i32_1 = arith.constant 0 : i32
    return %c0_i32, %c0_i32_0 : i32, i32
  }
  func.func @transform_1(%arg0: i32) -> (i32, i32, i32) {
    %c0_i32 = arith.constant 0 : i32
    %c0_i32_0 = arith.constant 0 : i32
    %c0_i32_1 = arith.constant 0 : i32
    return %arg0, %c0_i32, %c0_i32_0 : i32, i32, i32
  }
  func.func @transform_2(%arg0: i32) -> (i32, i32, i32) {
    %c0_i32 = arith.constant 0 : i32
    %c0_i32_0 = arith.constant 0 : i32
    %c0_i32_1 = arith.constant 0 : i32
    %c0_i32_2 = arith.constant 0 : i32
    return %c0_i32, %c0_i32_0, %c0_i32_1 : i32, i32, i32
  }
  func.func @transform_3(%arg0: i32) -> (i32, i32) {
    %c0_i32 = arith.constant 0 : i32
    %c0_i32_0 = arith.constant 0 : i32
    return %c0_i32, %arg0 : i32, i32
  }
}

</mosaic_0001>

<llo_original>
// kernel: tpu_custom_call.1
$region0: #{tpu_custom_call.1}
  #allocation0 [shape = 'u32[]', space=smem, size = 0x4, offset = 0x4, fixed_abs, tag = 'smem constant byte address 0x4 - core index']
  #allocation1 [shape = 'u32[72,128]{1,0:T(1,128)}', space=vmem, size = 0x9000, scoped, tag = 'internal scratch']
  %s0 = inlined_call_operand.vmem [shape: s32[5,128], index: 0, kind: input, shape index: {}]
  %s1 = inlined_call_operand.vmem [shape: s32[2,5,8], index: 1, kind: input, shape index: {}]
  %s2 = inlined_call_operand.hbm [shape: f32[5,8,64], index: 2, kind: input, shape index: {}]
  %s3 = inlined_call_operand.hbm [shape: f32[8,2048], index: 3, kind: output, shape index: {}]
  %s4 = sld [smem:[#allocation0]]
  $region49: #{tpu_custom_call.1} parent=0
    _
  %s6 = ssub.s32 1, %s4
  %s7 = scalar_select 0, %s6, %s4
  $region1: #{tpu_custom_call.1} parent=0
    #allocation2 [shape = 'u8[20480]{0}', space=vmem, size = 0x5000, scoped, tag = 'input window, operand 2, single buffered']
    #allocation3 [shape = 's32[2]{0}', space=sflag, size = 0x8, scoped, tag = 'scoped memory for tpu_custom_call.1']
    #allocation4 [shape = 's32[2]{0}', space=sflag, size = 0x8, scoped, tag = 'scoped memory for tpu_custom_call.1']
    #allocation5 [shape = 'u8[65536]{0}', space=vmem, size = 0x10000, scoped, tag = 'output window, operand 0']
    %8 = vsyncpa [#allocation3], 0
    %9 = vsyncpa [#allocation4], 0
    %s10 = scalar_lea.sflag [#allocation4], 1
    %11 = vsyncpa %s10, 0
    loop: start=0, step=1, limit=4
    $region2: #{tpu_custom_call.1} parent=1 // loop_pre_header
      _
    $region3: #{tpu_custom_call.1} parent=1 // loop_header
      %s13 = sphi 0, %s17
      %p14 = scmp.ge.s32.totalorder %s13, 4
      %s21 = sphi 0, %s21
      %s23 = sphi 0, %s21
      %s24 = sphi 0, %s23
      %s38 = sphi 0, %s24
      %s44 = sphi 0, %s46
      %s47 = sphi 0, %s44
      %s48 = sphi 0, %s47
      %s64 = sphi 0, %s48
      %s68 = sphi 0, %s68
      %s70 = sphi 0, %s68
      %s71 = sphi 0, %s70
      %s85 = sphi 0, %s71
      %s91 = sphi 0, %s93
      %s94 = sphi 0, %s91
      %s95 = sphi 0, %s94
      %s111 = sphi 0, %s95
    $region4: #{tpu_custom_call.1} parent=1 // loop_header_branch
      %16 = sbr.rel (%p14) target = $region8
    $region5: #{tpu_custom_call.1} parent=1 // loop_body
      %s18 = ssub.s32 %s13, 1
      %s19 = ssub.s32 %s13, 2
      %s20 = sadd.s32 %s13, 1
      %s22 = sadd.s32 %s21, 1
      %p25 = scmp.eq.s32.totalorder %s13, 1
      %p26 = scmp.ne.s32.totalorder %s21, %s23
      %p27 = scmp.eq.s32.totalorder %s13, 0
      %p28 = por %p26, %p27
      %p29 = scmp.ne.s32.totalorder %s21, %s23
      %p30 = scmp.eq.s32.totalorder %s18, 1
      %p31 = por %p29, %p30
      %p32 = scmp.ne.s32.totalorder %s23, %s24
      %p33 = scmp.eq.s32.totalorder %s18, 0
      %p34 = por %p32, %p33
      %p35 = scmp.ne.s32.totalorder %s23, %s24
      %p36 = scmp.eq.s32.totalorder %s19, 1
      %p37 = por %p35, %p36
      %p39 = scmp.ne.s32.totalorder %s24, %s38
      %p40 = scmp.eq.s32.totalorder %s19, 0
      %p41 = por %p39, %p40
      %s42 = ssub.s32 %s13, %s20
      %p43 = scmp.eq.s32.totalorder %s42, 0
      %s45 = sadd.s32 %s44, 1
      %s46 = scalar_select %p43, %s44, %s45
      %p49 = pneg %p43
      %p50 = scmp.eq.s32.totalorder %s13, 1
      %p51 = por %p49, %p50
      %p52 = scmp.ne.s32.totalorder %s44, %s47
      %p53 = scmp.eq.s32.totalorder %s13, 0
      %p54 = por %p52, %p53
      %p55 = scmp.ne.s32.totalorder %s44, %s47
      %p56 = scmp.eq.s32.totalorder %s18, 1
      %p57 = por %p55, %p56
      %p58 = scmp.ne.s32.totalorder %s47, %s48
      %p59 = scmp.eq.s32.totalorder %s18, 0
      %p60 = por %p58, %p59
      %p61 = scmp.ne.s32.totalorder %s47, %s48
      %p62 = scmp.eq.s32.totalorder %s19, 1
      %p63 = por %p61, %p62
      %p65 = scmp.ne.s32.totalorder %s48, %s64
      %p66 = scmp.eq.s32.totalorder %s19, 0
      %p67 = por %p65, %p66
      %s69 = sadd.s32 %s68, 1
      %p72 = scmp.eq.s32.totalorder %s13, 1
      %p73 = scmp.ne.s32.totalorder %s68, %s70
      %p74 = scmp.eq.s32.totalorder %s13, 0
      %p75 = por %p73, %p74
      %p76 = scmp.ne.s32.totalorder %s68, %s70
      %p77 = scmp.eq.s32.totalorder %s18, 1
      %p78 = por %p76, %p77
      %p79 = scmp.ne.s32.totalorder %s70, %s71
      %p80 = scmp.eq.s32.totalorder %s18, 0
      %p81 = por %p79, %p80
      %p82 = scmp.ne.s32.totalorder %s70, %s71
      %p83 = scmp.eq.s32.totalorder %s19, 1
      %p84 = por %p82, %p83
      %p86 = scmp.ne.s32.totalorder %s71, %s85
      %p87 = scmp.eq.s32.totalorder %s19, 0
      %p88 = por %p86, %p87
      %s89 = ssub.s32 %s13, %s20
      %p90 = scmp.eq.s32.totalorder %s89, 0
      %s92 = sadd.s32 %s91, 1
      %s93 = scalar_select %p90, %s91, %s92
      %p96 = pneg %p90
      %p97 = scmp.eq.s32.totalorder %s13, 1
      %p98 = por %p96, %p97
      %p99 = scmp.ne.s32.totalorder %s91, %s94
      %p100 = scmp.eq.s32.totalorder %s13, 0
      %p101 = por %p99, %p100
      %p102 = scmp.ne.s32.totalorder %s91, %s94
      %p103 = scmp.eq.s32.totalorder %s18, 1
      %p104 = por %p102, %p103
      %p105 = scmp.ne.s32.totalorder %s94, %s95
      %p106 = scmp.eq.s32.totalorder %s18, 0
      %p107 = por %p105, %p106
      %p108 = scmp.ne.s32.totalorder %s94, %s95
      %p109 = scmp.eq.s32.totalorder %s19, 1
      %p110 = por %p108, %p109
      %p112 = scmp.ne.s32.totalorder %s95, %s111
      %p113 = scmp.eq.s32.totalorder %s19, 0
      %p114 = por %p112, %p113
      %p115 = scmp.le.s32.totalorder 1, %s13
      %p116 = scmp.lt.s32.totalorder %s13, 3
      %p117 = pnand %p115, %p116
      %p118 = pneg %p117
      // Predicated region
      $region9: #{tpu_custom_call.1} parent=5 // pred_check
        _
      $region10: #{tpu_custom_call.1} parent=5 // pred_check_branch
        %120 = sbr.rel (%p117) target = $region12
      $region11: #{tpu_custom_call.1} parent=5 // pred_region
        %s121 = ssub.s32 %s13, 1
        // Predicated region
        $region13: #{tpu_custom_call.1} parent=11 // pred_check
          %p122 = pneg %p34
        $region14: #{tpu_custom_call.1} parent=11 // pred_check_branch
          %124 = sbr.rel (%p122) target = $region16
        $region15: #{tpu_custom_call.1} parent=11 // pred_region
          _
        $region16: #{tpu_custom_call.1} parent=11 // pred_fallthru
          _
        // Predicated region
        $region17: #{tpu_custom_call.1} parent=11 // pred_check
          %p125 = pneg %p81
        $region18: #{tpu_custom_call.1} parent=11 // pred_check_branch
          %127 = sbr.rel (%p125) target = $region20
        $region19: #{tpu_custom_call.1} parent=11 // pred_region
          %129 = vsyncadd [#allocation3], 0
          %s130 = sshll.u32 %s2, 4
          %s131 = int_to_ptr.hbm [resolvable:$true] %s130
          %s132 = sshll.u32 [#allocation2], 4
          %s133 = int_to_ptr.vmem [resolvable:$true] %s132
          %138 = dma.hbm_to_vmem [thread:$0]  %s131, 640, %s133, [#allocation3], 128, 128, 8
        $region20: #{tpu_custom_call.1} parent=11 // pred_fallthru
          _
      $region12: #{tpu_custom_call.1} parent=5 // pred_fallthru
        _
      %p139 = scmp.lt.s32.totalorder %s13, 2
      // Predicated region
      $region21: #{tpu_custom_call.1} parent=5 // pred_check
        %p140 = pneg %p139
      $region22: #{tpu_custom_call.1} parent=5 // pred_check_branch
        %142 = sbr.rel (%p140) target = $region24
      $region23: #{tpu_custom_call.1} parent=5 // pred_region
        // Predicated region
        $region25: #{tpu_custom_call.1} parent=23 // pred_check
          %p143 = pneg %p54
        $region26: #{tpu_custom_call.1} parent=23 // pred_check_branch
          %145 = sbr.rel (%p143) target = $region28
        $region27: #{tpu_custom_call.1} parent=23 // pred_region
          %p146 = scmp.lt.s32.totalorder %s13, 1
          %s147 = scalar_select %p146, %s13, 1
          %s148 = smul.addr %s147, 8
          %s149 = scalar_lea.vmem %s1, %s148
        $region28: #{tpu_custom_call.1} parent=23 // pred_fallthru
          _
      $region24: #{tpu_custom_call.1} parent=5 // pred_fallthru
        _
      %p150 = scmp.le.s32.totalorder 1, %s13
      %p151 = scmp.lt.s32.totalorder %s13, 3
      %p152 = pnand %p150, %p151
      %p153 = pneg %p152
      // Predicated region
      $region29: #{tpu_custom_call.1} parent=5 // pred_check
        _
      $region30: #{tpu_custom_call.1} parent=5 // pred_check_branch
        %155 = sbr.rel (%p152) target = $region32
      $region31: #{tpu_custom_call.1} parent=5 // pred_region
        %s156 = ssub.s32 %s13, 1
        // Predicated region
        $region33: #{tpu_custom_call.1} parent=31 // pred_check
          %p157 = pneg %p81
        $region34: #{tpu_custom_call.1} parent=31 // pred_check_branch
          %159 = sbr.rel (%p157) target = $region36
        $region35: #{tpu_custom_call.1} parent=31 // pred_region
          %161 = dma.done [#allocation3], 640
        $region36: #{tpu_custom_call.1} parent=31 // pred_fallthru
          _
        %p162 = pneg %p34
        %p163 = pneg %p31
        %p164 = scmp.lt.s32.totalorder %s18, 1
        %s165 = scalar_select %p164, %s18, 1
        %s166 = smul.addr %s165, 8
        %s167 = scalar_lea.vmem %s1, %s166
        %p168 = pneg %p60
        %p169 = pneg %p57
        %p170 = pneg %p81
        %p171 = pneg %p78
        %p172 = pneg %p107
        %p173 = pneg %p104
        %s174 = sand.u32 %s94, 1
        %s175 = scalar_lea.sflag [#allocation4], %s174
        %s176 = sand.u32 %s94, 1
        %s177 = smul.addr %s176, 64
        %s178 = scalar_lea.vmem [#allocation5], %s177
        %p179 = scmp.lt.s32.totalorder %s18, 1
        %s180 = scalar_select %p179, %s18, 1
        %s181 = smul.addr %s180, 8
        %s182 = scalar_lea.vmem %s1, %s181
        %s183 = smul.u32 8, %s18
        %v184 = vld [vmem:[%s0] sm:$0x1f]
        %v185 = vld [vmem:[%s182] sm:$0x1f]
        %186 = vset.pattern.permute.xlu0 0
        %187 = vperm.xlu0 %186, %v185
        %v188 = vpop.permute.xlu0 %187
        %v189 = vsub.s32 %v184, %v188
        %190 = vset.pattern.permute.xlu0 1
        %191 = vperm.xlu0 %190, %v185
        %v192 = vpop.permute.xlu0 %191
        %v193 = vsub.s32 %v184, %v192
        %194 = vset.pattern.permute.xlu0 2
        %195 = vperm.xlu0 %194, %v185
        %v196 = vpop.permute.xlu0 %195
        %v197 = vsub.s32 %v184, %v196
        %198 = vset.pattern.permute.xlu0 3
        %199 = vperm.xlu0 %198, %v185
        %v200 = vpop.permute.xlu0 %199
        %v201 = vsub.s32 %v184, %v200
        %202 = vset.pattern.permute.xlu0 4
        %203 = vperm.xlu0 %202, %v185
        %v204 = vpop.permute.xlu0 %203
        %v205 = vsub.s32 %v184, %v204
        %206 = vset.pattern.permute.xlu0 5
        %207 = vperm.xlu0 %206, %v185
        %v208 = vpop.permute.xlu0 %207
        %v209 = vsub.s32 %v184, %v208
        %210 = vset.pattern.permute.xlu0 6
        %211 = vperm.xlu0 %210, %v185
        %v212 = vpop.permute.xlu0 %211
        %v213 = vsub.s32 %v184, %v212
        %214 = vset.pattern.permute.xlu0 7
        %215 = vperm.xlu0 %214, %v185
        %v216 = vpop.permute.xlu0 %215
        %v217 = vsub.s32 %v184, %v216
        %vm218 = vcmp.gt.s32.totalorder %v189, 0
        %vm219 = vcmp.gt.s32.totalorder %v193, 0
        %vm220 = vcmp.gt.s32.totalorder %v197, 0
        %vm221 = vcmp.gt.s32.totalorder %v201, 0
        %vm222 = vcmp.gt.s32.totalorder %v205, 0
        %vm223 = vcmp.gt.s32.totalorder %v209, 0
        %vm224 = vcmp.gt.s32.totalorder %v213, 0
        %vm225 = vcmp.gt.s32.totalorder %v217, 0
        %v226 = vsel %vm218, 32, 0
        %v227 = vsel %vm219, 32, 0
        %v228 = vsel %vm220, 32, 0
        %v229 = vsel %vm221, 32, 0
        %v230 = vsel %vm222, 32, 0
        %v231 = vsel %vm223, 32, 0
        %v232 = vsel %vm224, 32, 0
        %v233 = vsel %vm225, 32, 0
        %vm234 = vcmp.lt.s32.totalorder %v189, 0
        %v235 = vsub.s32 0, %v189
        %v236 = vsel %vm234, %v235, %v189
        %vm237 = vcmp.lt.s32.totalorder %v193, 0
        %v238 = vsub.s32 0, %v193
        %v239 = vsel %vm237, %v238, %v193
        %vm240 = vcmp.lt.s32.totalorder %v197, 0
        %v241 = vsub.s32 0, %v197
        %v242 = vsel %vm240, %v241, %v197
        %vm243 = vcmp.lt.s32.totalorder %v201, 0
        %v244 = vsub.s32 0, %v201
        %v245 = vsel %vm243, %v244, %v201
        %vm246 = vcmp.lt.s32.totalorder %v205, 0
        %v247 = vsub.s32 0, %v205
        %v248 = vsel %vm246, %v247, %v205
        %vm249 = vcmp.lt.s32.totalorder %v209, 0
        %v250 = vsub.s32 0, %v209
        %v251 = vsel %vm249, %v250, %v209
        %vm252 = vcmp.lt.s32.totalorder %v213, 0
        %v253 = vsub.s32 0, %v213
        %v254 = vsel %vm252, %v253, %v213
        %vm255 = vcmp.lt.s32.totalorder %v217, 0
        %v256 = vsub.s32 0, %v217
        %v257 = vsel %vm255, %v256, %v217
        %v258 = vcvt.s32.f32 %v236
        %v259 = vcvt.s32.f32 %v239
        %v260 = vcvt.s32.f32 %v242
        %v261 = vcvt.s32.f32 %v245
        %v262 = vcvt.s32.f32 %v248
        %v263 = vcvt.s32.f32 %v251
        %v264 = vcvt.s32.f32 %v254
        %v265 = vcvt.s32.f32 %v257
        %v266 = vmax.f32 %v258, 1.0
        %v267 = vmax.f32 %v259, 1.0
        %v268 = vmax.f32 %v260, 1.0
        %v269 = vmax.f32 %v261, 1.0
        %v270 = vmax.f32 %v262, 1.0
        %v271 = vmax.f32 %v263, 1.0
        %v272 = vmax.f32 %v264, 1.0
        %v273 = vmax.f32 %v265, 1.0
        %v274 = vrcp.pop 16.0
        %v275 = vmul.f32 16.0, %v274
        %v276 = vsub.f32 1.0, %v275
        %v277 = vmul.f32 %v274, %v276
        %v278 = vadd.f32 %v274, %v277
        %vm279 = vweird.f32 %v274
        %v280 = vsel %vm279, %v274, %v278
        %v281 = vmul.f32 %v266, %v280
        %v282 = vmul.f32 %v267, %v280
        %v283 = vmul.f32 %v268, %v280
        %v284 = vmul.f32 %v269, %v280
        %v285 = vmul.f32 %v270, %v280
        %v286 = vmul.f32 %v271, %v280
        %v287 = vmul.f32 %v272, %v280
        %v288 = vmul.f32 %v273, %v280
        %v289 = vlog2.pop %v281
        %v290 = vmul.f32 %v289, 0.6931472
        %v291 = vlog2.pop %v282
        %v292 = vmul.f32 %v291, 0.6931472
        %v293 = vlog2.pop %v283
        %v294 = vmul.f32 %v293, 0.6931472
        %v295 = vlog2.pop %v284
        %v296 = vmul.f32 %v295, 0.6931472
        %v297 = vlog2.pop %v285
        %v298 = vmul.f32 %v297, 0.6931472
        %v299 = vlog2.pop %v286
        %v300 = vmul.f32 %v299, 0.6931472
        %v301 = vlog2.pop %v287
        %v302 = vmul.f32 %v301, 0.6931472
        %v303 = vlog2.pop %v288
        %v304 = vmul.f32 %v303, 0.6931472
        %v305 = vrcp.pop 2.7725887
        %v306 = vmul.f32 2.7725887, %v305
        %v307 = vsub.f32 1.0, %v306
        %v308 = vmul.f32 %v305, %v307
        %v309 = vadd.f32 %v305, %v308
        %vm310 = vweird.f32 %v305
        %v311 = vsel %vm310, %v305, %v309
        %v312 = vmul.f32 %v290, %v311
        %v313 = vmul.f32 %v292, %v311
        %v314 = vmul.f32 %v294, %v311
        %v315 = vmul.f32 %v296, %v311
        %v316 = vmul.f32 %v298, %v311
        %v317 = vmul.f32 %v300, %v311
        %v318 = vmul.f32 %v302, %v311
        %v319 = vmul.f32 %v304, %v311
        %v320 = vmul.f32 %v312, 16.0
        %v321 = vmul.f32 %v313, 16.0
        %v322 = vmul.f32 %v314, 16.0
        %v323 = vmul.f32 %v315, 16.0
        %v324 = vmul.f32 %v316, 16.0
        %v325 = vmul.f32 %v317, 16.0
        %v326 = vmul.f32 %v318, 16.0
        %v327 = vmul.f32 %v319, 16.0
        %v328 = vcvt.f32.s32.to.zero.pseudo %v320
        %v329 = vcvt.f32.s32.to.zero.pseudo %v321
        %v330 = vcvt.f32.s32.to.zero.pseudo %v322
        %v331 = vcvt.f32.s32.to.zero.pseudo %v323
        %v332 = vcvt.f32.s32.to.zero.pseudo %v324
        %v333 = vcvt.f32.s32.to.zero.pseudo %v325
        %v334 = vcvt.f32.s32.to.zero.pseudo %v326
        %v335 = vcvt.f32.s32.to.zero.pseudo %v327
        %v336 = vadd.s32 %v328, 16
        %v337 = vadd.s32 %v329, 16
        %v338 = vadd.s32 %v330, 16
        %v339 = vadd.s32 %v331, 16
        %v340 = vadd.s32 %v332, 16
        %v341 = vadd.s32 %v333, 16
        %v342 = vadd.s32 %v334, 16
        %v343 = vadd.s32 %v335, 16
        %vm344 = vcmp.lt.s32.totalorder %v336, 31
        %v345 = vsel %vm344, %v336, 31
        %vm346 = vcmp.lt.s32.totalorder %v337, 31
        %v347 = vsel %vm346, %v337, 31
        %vm348 = vcmp.lt.s32.totalorder %v338, 31
        %v349 = vsel %vm348, %v338, 31
        %vm350 = vcmp.lt.s32.totalorder %v339, 31
        %v351 = vsel %vm350, %v339, 31
        %vm352 = vcmp.lt.s32.totalorder %v340, 31
        %v353 = vsel %vm352, %v340, 31
        %vm354 = vcmp.lt.s32.totalorder %v341, 31
        %v355 = vsel %vm354, %v341, 31
        %vm356 = vcmp.lt.s32.totalorder %v342, 31
        %v357 = vsel %vm356, %v342, 31
        %vm358 = vcmp.lt.s32.totalorder %v343, 31
        %v359 = vsel %vm358, %v343, 31
        %vm360 = vcmp.lt.s32.totalorder %v236, 16
        %vm361 = vcmp.lt.s32.totalorder %v239, 16
        %vm362 = vcmp.lt.s32.totalorder %v242, 16
        %vm363 = vcmp.lt.s32.totalorder %v245, 16
        %vm364 = vcmp.lt.s32.totalorder %v248, 16
        %vm365 = vcmp.lt.s32.totalorder %v251, 16
        %vm366 = vcmp.lt.s32.totalorder %v254, 16
        %vm367 = vcmp.lt.s32.totalorder %v257, 16
        %v368 = vsel %vm360, %v236, %v345
        %v369 = vsel %vm361, %v239, %v347
        %v370 = vsel %vm362, %v242, %v349
        %v371 = vsel %vm363, %v245, %v351
        %v372 = vsel %vm364, %v248, %v353
        %v373 = vsel %vm365, %v251, %v355
        %v374 = vsel %vm366, %v254, %v357
        %v375 = vsel %vm367, %v257, %v359
        %v376 = vadd.s32 %v226, %v368
        %v377 = vadd.s32 %v227, %v369
        %v378 = vadd.s32 %v228, %v370
        %v379 = vadd.s32 %v229, %v371
        %v380 = vadd.s32 %v230, %v372
        %v381 = vadd.s32 %v231, %v373
        %v382 = vadd.s32 %v232, %v374
        %v383 = vadd.s32 %v233, %v375
        %v384 = vlaneseq
        %v385 = vshrl.u32 %v384, 7
        %v386 = vadd.s32 %v385, 8
        %v387 = vadd.s32 %v385, 16
        %v388 = vadd.s32 %v385, 24
        %v389 = vadd.s32 %v385, 32
        %v390 = vadd.s32 %v385, 40
        %v391 = vadd.s32 %v385, 48
        %v392 = vadd.s32 %v385, 56
        %v393 = vld [vmem:[#allocation2] sm:$0xff]
        %v394 = vperm.slane %v376, 0
        %v395 = vperm.slane %v377, 0
        %v396 = vperm.slane %v378, 0
        %v397 = vperm.slane %v379, 0
        %v398 = vperm.slane %v380, 0
        %v399 = vperm.slane %v381, 0
        %v400 = vperm.slane %v382, 0
        %v401 = vperm.slane %v383, 0
        %vm402 = vcmp.eq.s32.totalorder %v385, %v394
        %vm403 = vcmp.eq.s32.totalorder %v385, %v395
        %vm404 = vcmp.eq.s32.totalorder %v385, %v396
        %vm405 = vcmp.eq.s32.totalorder %v385, %v397
        %vm406 = vcmp.eq.s32.totalorder %v385, %v398
        %vm407 = vcmp.eq.s32.totalorder %v385, %v399
        %vm408 = vcmp.eq.s32.totalorder %v385, %v400
        %vm409 = vcmp.eq.s32.totalorder %v385, %v401
        %vm410 = vcmp.eq.s32.totalorder %v386, %v394
        %vm411 = vcmp.eq.s32.totalorder %v386, %v395
        %vm412 = vcmp.eq.s32.totalorder %v386, %v396
        %vm413 = vcmp.eq.s32.totalorder %v386, %v397
        %vm414 = vcmp.eq.s32.totalorder %v386, %v398
        %vm415 = vcmp.eq.s32.totalorder %v386, %v399
        %vm416 = vcmp.eq.s32.totalorder %v386, %v400
        %vm417 = vcmp.eq.s32.totalorder %v386, %v401
        %vm418 = vcmp.eq.s32.totalorder %v387, %v394
        %vm419 = vcmp.eq.s32.totalorder %v387, %v395
        %vm420 = vcmp.eq.s32.totalorder %v387, %v396
        %vm421 = vcmp.eq.s32.totalorder %v387, %v397
        %vm422 = vcmp.eq.s32.totalorder %v387, %v398
        %vm423 = vcmp.eq.s32.totalorder %v387, %v399
        %vm424 = vcmp.eq.s32.totalorder %v387, %v400
        %vm425 = vcmp.eq.s32.totalorder %v387, %v401
        %vm426 = vcmp.eq.s32.totalorder %v388, %v394
        %vm427 = vcmp.eq.s32.totalorder %v388, %v395
        %vm428 = vcmp.eq.s32.totalorder %v388, %v396
        %vm429 = vcmp.eq.s32.totalorder %v388, %v397
        %vm430 = vcmp.eq.s32.totalorder %v388, %v398
        %vm431 = vcmp.eq.s32.totalorder %v388, %v399
        %vm432 = vcmp.eq.s32.totalorder %v388, %v400
        %vm433 = vcmp.eq.s32.totalorder %v388, %v401
        %vm434 = vcmp.eq.s32.totalorder %v389, %v394
        %vm435 = vcmp.eq.s32.totalorder %v389, %v395
        %vm436 = vcmp.eq.s32.totalorder %v389, %v396
        %vm437 = vcmp.eq.s32.totalorder %v389, %v397
        %vm438 = vcmp.eq.s32.totalorder %v389, %v398
        %vm439 = vcmp.eq.s32.totalorder %v389, %v399
        %vm440 = vcmp.eq.s32.totalorder %v389, %v400
        %vm441 = vcmp.eq.s32.totalorder %v389, %v401
        %vm442 = vcmp.eq.s32.totalorder %v390, %v394
        %vm443 = vcmp.eq.s32.totalorder %v390, %v395
        %vm444 = vcmp.eq.s32.totalorder %v390, %v396
        %vm445 = vcmp.eq.s32.totalorder %v390, %v397
        %vm446 = vcmp.eq.s32.totalorder %v390, %v398
        %vm447 = vcmp.eq.s32.totalorder %v390, %v399
        %vm448 = vcmp.eq.s32.totalorder %v390, %v400
        %vm449 = vcmp.eq.s32.totalorder %v390, %v401
        %vm450 = vcmp.eq.s32.totalorder %v391, %v394
        %vm451 = vcmp.eq.s32.totalorder %v391, %v395
        %vm452 = vcmp.eq.s32.totalorder %v391, %v396
        %vm453 = vcmp.eq.s32.totalorder %v391, %v397
        %vm454 = vcmp.eq.s32.totalorder %v391, %v398
        %vm455 = vcmp.eq.s32.totalorder %v391, %v399
        %vm456 = vcmp.eq.s32.totalorder %v391, %v400
        %vm457 = vcmp.eq.s32.totalorder %v391, %v401
        %vm458 = vcmp.eq.s32.totalorder %v392, %v394
        %vm459 = vcmp.eq.s32.totalorder %v392, %v395
        %vm460 = vcmp.eq.s32.totalorder %v392, %v396
        %vm461 = vcmp.eq.s32.totalorder %v392, %v397
        %vm462 = vcmp.eq.s32.totalorder %v392, %v398
        %vm463 = vcmp.eq.s32.totalorder %v392, %v399
        %vm464 = vcmp.eq.s32.totalorder %v392, %v400
        %vm465 = vcmp.eq.s32.totalorder %v392, %v401
        %v466 = vsel %vm402, 1, 0
        %v467 = vsel %vm403, 1, 0
        %v468 = vsel %vm404, 1, 0
        %v469 = vsel %vm405, 1, 0
        %v470 = vsel %vm406, 1, 0
        %v471 = vsel %vm407, 1, 0
        %v472 = vsel %vm408, 1, 0
        %v473 = vsel %vm409, 1, 0
        %v474 = vsel %vm410, 1, 0
        %v475 = vsel %vm411, 1, 0
        %v476 = vsel %vm412, 1, 0
        %v477 = vsel %vm413, 1, 0
        %v478 = vsel %vm414, 1, 0
        %v479 = vsel %vm415, 1, 0
        %v480 = vsel %vm416, 1, 0
        %v481 = vsel %vm417, 1, 0
        %v482 = vsel %vm418, 1, 0
        %v483 = vsel %vm419, 1, 0
        %v484 = vsel %vm420, 1, 0
        %v485 = vsel %vm421, 1, 0
        %v486 = vsel %vm422, 1, 0
        %v487 = vsel %vm423, 1, 0
        %v488 = vsel %vm424, 1, 0
        %v489 = vsel %vm425, 1, 0
        %v490 = vsel %vm426, 1, 0
        %v491 = vsel %vm427, 1, 0
        %v492 = vsel %vm428, 1, 0
        %v493 = vsel %vm429, 1, 0
        %v494 = vsel %vm430, 1, 0
        %v495 = vsel %vm431, 1, 0
        %v496 = vsel %vm432, 1, 0
        %v497 = vsel %vm433, 1, 0
        %v498 = vsel %vm434, 1, 0
        %v499 = vsel %vm435, 1, 0
        %v500 = vsel %vm436, 1, 0
        %v501 = vsel %vm437, 1, 0
        %v502 = vsel %vm438, 1, 0
        %v503 = vsel %vm439, 1, 0
        %v504 = vsel %vm440, 1, 0
        %v505 = vsel %vm441, 1, 0
        %v506 = vsel %vm442, 1, 0
        %v507 = vsel %vm443, 1, 0
        %v508 = vsel %vm444, 1, 0
        %v509 = vsel %vm445, 1, 0
        %v510 = vsel %vm446, 1, 0
        %v511 = vsel %vm447, 1, 0
        %v512 = vsel %vm448, 1, 0
        %v513 = vsel %vm449, 1, 0
        %v514 = vsel %vm450, 1, 0
        %v515 = vsel %vm451, 1, 0
        %v516 = vsel %vm452, 1, 0
        %v517 = vsel %vm453, 1, 0
        %v518 = vsel %vm454, 1, 0
        %v519 = vsel %vm455, 1, 0
        %v520 = vsel %vm456, 1, 0
        %v521 = vsel %vm457, 1, 0
        %v522 = vsel %vm458, 1, 0
        %v523 = vsel %vm459, 1, 0
        %v524 = vsel %vm460, 1, 0
        %v525 = vsel %vm461, 1, 0
        %v526 = vsel %vm462, 1, 0
        %v527 = vsel %vm463, 1, 0
        %v528 = vsel %vm464, 1, 0
        %v529 = vsel %vm465, 1, 0
        %v530 = vcvt.s32.f32 %v466
        %v531 = vcvt.s32.f32 %v467
        %v532 = vcvt.s32.f32 %v468
        %v533 = vcvt.s32.f32 %v469
        %v534 = vcvt.s32.f32 %v470
        %v535 = vcvt.s32.f32 %v471
        %v536 = vcvt.s32.f32 %v472
        %v537 = vcvt.s32.f32 %v473
        %v538 = vcvt.s32.f32 %v474
        %v539 = vcvt.s32.f32 %v475
        %v540 = vcvt.s32.f32 %v476
        %v541 = vcvt.s32.f32 %v477
        %v542 = vcvt.s32.f32 %v478
        %v543 = vcvt.s32.f32 %v479
        %v544 = vcvt.s32.f32 %v480
        %v545 = vcvt.s32.f32 %v481
        %v546 = vcvt.s32.f32 %v482
        %v547 = vcvt.s32.f32 %v483
        %v548 = vcvt.s32.f32 %v484
        %v549 = vcvt.s32.f32 %v485
        %v550 = vcvt.s32.f32 %v486
        %v551 = vcvt.s32.f32 %v487
        %v552 = vcvt.s32.f32 %v488
        %v553 = vcvt.s32.f32 %v489
        %v554 = vcvt.s32.f32 %v490
        %v555 = vcvt.s32.f32 %v491
        %v556 = vcvt.s32.f32 %v492
        %v557 = vcvt.s32.f32 %v493
        %v558 = vcvt.s32.f32 %v494
        %v559 = vcvt.s32.f32 %v495
        %v560 = vcvt.s32.f32 %v496
        %v561 = vcvt.s32.f32 %v497
        %v562 = vcvt.s32.f32 %v498
        %v563 = vcvt.s32.f32 %v499
        %v564 = vcvt.s32.f32 %v500
        %v565 = vcvt.s32.f32 %v501
        %v566 = vcvt.s32.f32 %v502
        %v567 = vcvt.s32.f32 %v503
        %v568 = vcvt.s32.f32 %v504
        %v569 = vcvt.s32.f32 %v505
        %v570 = vcvt.s32.f32 %v506
        %v571 = vcvt.s32.f32 %v507
        %v572 = vcvt.s32.f32 %v508
        %v573 = vcvt.s32.f32 %v509
        %v574 = vcvt.s32.f32 %v510
        %v575 = vcvt.s32.f32 %v511
        %v576 = vcvt.s32.f32 %v512
        %v577 = vcvt.s32.f32 %v513
        %v578 = vcvt.s32.f32 %v514
        %v579 = vcvt.s32.f32 %v515
        %v580 = vcvt.s32.f32 %v516
        %v581 = vcvt.s32.f32 %v517
        %v582 = vcvt.s32.f32 %v518
        %v583 = vcvt.s32.f32 %v519
        %v584 = vcvt.s32.f32 %v520
        %v585 = vcvt.s32.f32 %v521
        %v586 = vcvt.s32.f32 %v522
        %v587 = vcvt.s32.f32 %v523
        %v588 = vcvt.s32.f32 %v524
        %v589 = vcvt.s32.f32 %v525
        %v590 = vcvt.s32.f32 %v526
        %v591 = vcvt.s32.f32 %v527
        %v592 = vcvt.s32.f32 %v528
        %v593 = vcvt.s32.f32 %v529
        %s594 = scalar_lea.vmem [#allocation2], 8
        %v595 = vld [vmem:[%s594] sm:$0xff]
        %v596 = vperm.slane %v376, 1
        %v597 = vperm.slane %v377, 1
        %v598 = vperm.slane %v378, 1
        %v599 = vperm.slane %v379, 1
        %v600 = vperm.slane %v380, 1
        %v601 = vperm.slane %v381, 1
        %v602 = vperm.slane %v382, 1
        %v603 = vperm.slane %v383, 1
        %vm604 = vcmp.eq.s32.totalorder %v385, %v596
        %vm605 = vcmp.eq.s32.totalorder %v385, %v597
        %vm606 = vcmp.eq.s32.totalorder %v385, %v598
        %vm607 = vcmp.eq.s32.totalorder %v385, %v599
        %vm608 = vcmp.eq.s32.totalorder %v385, %v600
        %vm609 = vcmp.eq.s32.totalorder %v385, %v601
        %vm610 = vcmp.eq.s32.totalorder %v385, %v602
        %vm611 = vcmp.eq.s32.totalorder %v385, %v603
        %vm612 = vcmp.eq.s32.totalorder %v386, %v596
        %vm613 = vcmp.eq.s32.totalorder %v386, %v597
        %vm614 = vcmp.eq.s32.totalorder %v386, %v598
        %vm615 = vcmp.eq.s32.totalorder %v386, %v599
        %vm616 = vcmp.eq.s32.totalorder %v386, %v600
        %vm617 = vcmp.eq.s32.totalorder %v386, %v601
        %vm618 = vcmp.eq.s32.totalorder %v386, %v602
        %vm619 = vcmp.eq.s32.totalorder %v386, %v603
        %vm620 = vcmp.eq.s32.totalorder %v387, %v596
        %vm621 = vcmp.eq.s32.totalorder %v387, %v597
        %vm622 = vcmp.eq.s32.totalorder %v387, %v598
        %vm623 = vcmp.eq.s32.totalorder %v387, %v599
        %vm624 = vcmp.eq.s32.totalorder %v387, %v600
        %vm625 = vcmp.eq.s32.totalorder %v387, %v601
        %vm626 = vcmp.eq.s32.totalorder %v387, %v602
        %vm627 = vcmp.eq.s32.totalorder %v387, %v603
        %vm628 = vcmp.eq.s32.totalorder %v388, %v596
        %vm629 = vcmp.eq.s32.totalorder %v388, %v597
        %vm630 = vcmp.eq.s32.totalorder %v388, %v598
        %vm631 = vcmp.eq.s32.totalorder %v388, %v599
        %vm632 = vcmp.eq.s32.totalorder %v388, %v600
        %vm633 = vcmp.eq.s32.totalorder %v388, %v601
        %vm634 = vcmp.eq.s32.totalorder %v388, %v602
        %vm635 = vcmp.eq.s32.totalorder %v388, %v603
        %vm636 = vcmp.eq.s32.totalorder %v389, %v596
        %vm637 = vcmp.eq.s32.totalorder %v389, %v597
        %vm638 = vcmp.eq.s32.totalorder %v389, %v598
        %vm639 = vcmp.eq.s32.totalorder %v389, %v599
        %vm640 = vcmp.eq.s32.totalorder %v389, %v600
        %vm641 = vcmp.eq.s32.totalorder %v389, %v601
        %vm642 = vcmp.eq.s32.totalorder %v389, %v602
        %vm643 = vcmp.eq.s32.totalorder %v389, %v603
        %vm644 = vcmp.eq.s32.totalorder %v390, %v596
        %vm645 = vcmp.eq.s32.totalorder %v390, %v597
        %vm646 = vcmp.eq.s32.totalorder %v390, %v598
        %vm647 = vcmp.eq.s32.totalorder %v390, %v599
        %vm648 = vcmp.eq.s32.totalorder %v390, %v600
        %vm649 = vcmp.eq.s32.totalorder %v390, %v601
        %vm650 = vcmp.eq.s32.totalorder %v390, %v602
        %vm651 = vcmp.eq.s32.totalorder %v390, %v603
        %vm652 = vcmp.eq.s32.totalorder %v391, %v596
        %vm653 = vcmp.eq.s32.totalorder %v391, %v597
        %vm654 = vcmp.eq.s32.totalorder %v391, %v598
        %vm655 = vcmp.eq.s32.totalorder %v391, %v599
        %vm656 = vcmp.eq.s32.totalorder %v391, %v600
        %vm657 = vcmp.eq.s32.totalorder %v391, %v601
        %vm658 = vcmp.eq.s32.totalorder %v391, %v602
        %vm659 = vcmp.eq.s32.totalorder %v391, %v603
        %vm660 = vcmp.eq.s32.totalorder %v392, %v596
        %vm661 = vcmp.eq.s32.totalorder %v392, %v597
        %vm662 = vcmp.eq.s32.totalorder %v392, %v598
        %vm663 = vcmp.eq.s32.totalorder %v392, %v599
        %vm664 = vcmp.eq.s32.totalorder %v392, %v600
        %vm665 = vcmp.eq.s32.totalorder %v392, %v601
        %vm666 = vcmp.eq.s32.totalorder %v392, %v602
        %vm667 = vcmp.eq.s32.totalorder %v392, %v603
        %v668 = vsel %vm604, 1, 0
        %v669 = vsel %vm605, 1, 0
        %v670 = vsel %vm606, 1, 0
        %v671 = vsel %vm607, 1, 0
        %v672 = vsel %vm608, 1, 0
        %v673 = vsel %vm609, 1, 0
        %v674 = vsel %vm610, 1, 0
        %v675 = vsel %vm611, 1, 0
        %v676 = vsel %vm612, 1, 0
        %v677 = vsel %vm613, 1, 0
        %v678 = vsel %vm614, 1, 0
        %v679 = vsel %vm615, 1, 0
        %v680 = vsel %vm616, 1, 0
        %v681 = vsel %vm617, 1, 0
        %v682 = vsel %vm618, 1, 0
        %v683 = vsel %vm619, 1, 0
        %v684 = vsel %vm620, 1, 0
        %v685 = vsel %vm621, 1, 0
        %v686 = vsel %vm622, 1, 0
        %v687 = vsel %vm623, 1, 0
        %v688 = vsel %vm624, 1, 0
        %v689 = vsel %vm625, 1, 0
        %v690 = vsel %vm626, 1, 0
        %v691 = vsel %vm627, 1, 0
        %v692 = vsel %vm628, 1, 0
        %v693 = vsel %vm629, 1, 0
        %v694 = vsel %vm630, 1, 0
        %v695 = vsel %vm631, 1, 0
        %v696 = vsel %vm632, 1, 0
        %v697 = vsel %vm633, 1, 0
        %v698 = vsel %vm634, 1, 0
        %v699 = vsel %vm635, 1, 0
        %v700 = vsel %vm636, 1, 0
        %v701 = vsel %vm637, 1, 0
        %v702 = vsel %vm638, 1, 0
        %v703 = vsel %vm639, 1, 0
        %v704 = vsel %vm640, 1, 0
        %v705 = vsel %vm641, 1, 0
        %v706 = vsel %vm642, 1, 0
        %v707 = vsel %vm643, 1, 0
        %v708 = vsel %vm644, 1, 0
        %v709 = vsel %vm645, 1, 0
        %v710 = vsel %vm646, 1, 0
        %v711 = vsel %vm647, 1, 0
        %v712 = vsel %vm648, 1, 0
        %v713 = vsel %vm649, 1, 0
        %v714 = vsel %vm650, 1, 0
        %v715 = vsel %vm651, 1, 0
        %v716 = vsel %vm652, 1, 0
        %v717 = vsel %vm653, 1, 0
        %v718 = vsel %vm654, 1, 0
        %v719 = vsel %vm655, 1, 0
        %v720 = vsel %vm656, 1, 0
        %v721 = vsel %vm657, 1, 0
        %v722 = vsel %vm658, 1, 0
        %v723 = vsel %vm659, 1, 0
        %v724 = vsel %vm660, 1, 0
        %v725 = vsel %vm661, 1, 0
        %v726 = vsel %vm662, 1, 0
        %v727 = vsel %vm663, 1, 0
        %v728 = vsel %vm664, 1, 0
        %v729 = vsel %vm665, 1, 0
        %v730 = vsel %vm666, 1, 0
        %v731 = vsel %vm667, 1, 0
        %v732 = vcvt.s32.f32 %v668
        %v733 = vcvt.s32.f32 %v669
        %v734 = vcvt.s32.f32 %v670
        %v735 = vcvt.s32.f32 %v671
        %v736 = vcvt.s32.f32 %v672
        %v737 = vcvt.s32.f32 %v673
        %v738 = vcvt.s32.f32 %v674
        %v739 = vcvt.s32.f32 %v675
        %v740 = vcvt.s32.f32 %v676
        %v741 = vcvt.s32.f32 %v677
        %v742 = vcvt.s32.f32 %v678
        %v743 = vcvt.s32.f32 %v679
        %v744 = vcvt.s32.f32 %v680
        %v745 = vcvt.s32.f32 %v681
        %v746 = vcvt.s32.f32 %v682
        %v747 = vcvt.s32.f32 %v683
        %v748 = vcvt.s32.f32 %v684
        %v749 = vcvt.s32.f32 %v685
        %v750 = vcvt.s32.f32 %v686
        %v751 = vcvt.s32.f32 %v687
        %v752 = vcvt.s32.f32 %v688
        %v753 = vcvt.s32.f32 %v689
        %v754 = vcvt.s32.f32 %v690
        %v755 = vcvt.s32.f32 %v691
        %v756 = vcvt.s32.f32 %v692
        %v757 = vcvt.s32.f32 %v693
        %v758 = vcvt.s32.f32 %v694
        %v759 = vcvt.s32.f32 %v695
        %v760 = vcvt.s32.f32 %v696
        %v761 = vcvt.s32.f32 %v697
        %v762 = vcvt.s32.f32 %v698
        %v763 = vcvt.s32.f32 %v699
        %v764 = vcvt.s32.f32 %v700
        %v765 = vcvt.s32.f32 %v701
        %v766 = vcvt.s32.f32 %v702
        %v767 = vcvt.s32.f32 %v703
        %v768 = vcvt.s32.f32 %v704
        %v769 = vcvt.s32.f32 %v705
        %v770 = vcvt.s32.f32 %v706
        %v771 = vcvt.s32.f32 %v707
        %v772 = vcvt.s32.f32 %v708
        %v773 = vcvt.s32.f32 %v709
        %v774 = vcvt.s32.f32 %v710
        %v775 = vcvt.s32.f32 %v711
        %v776 = vcvt.s32.f32 %v712
        %v777 = vcvt.s32.f32 %v713
        %v778 = vcvt.s32.f32 %v714
        %v779 = vcvt.s32.f32 %v715
        %v780 = vcvt.s32.f32 %v716
        %v781 = vcvt.s32.f32 %v717
        %v782 = vcvt.s32.f32 %v718
        %v783 = vcvt.s32.f32 %v719
        %v784 = vcvt.s32.f32 %v720
        %v785 = vcvt.s32.f32 %v721
        %v786 = vcvt.s32.f32 %v722
        %v787 = vcvt.s32.f32 %v723
        %v788 = vcvt.s32.f32 %v724
        %v789 = vcvt.s32.f32 %v725
        %v790 = vcvt.s32.f32 %v726
        %v791 = vcvt.s32.f32 %v727
        %v792 = vcvt.s32.f32 %v728
        %v793 = vcvt.s32.f32 %v729
        %v794 = vcvt.s32.f32 %v730
        %v795 = vcvt.s32.f32 %v731
        %vm796 = vcmask 523264
        %v798 = vsel %vm796, %v595, 0
        %800 = vmatpush.msra.mxu0 0.0
        %801 = vmatpush.msra.mxu0 0.0
        %802 = vmatpush.msra.mxu0 0.0
        %803 = vmatpush.msra.mxu0 0.0
        %804 = vmatpush.msra.mxu0 0.0
        %805 = vmatpush.msra.mxu0 0.0
        %806 = vmatpush.msra.mxu0 0.0
        %807 = vmatpush.msra.mxu0 0.0
        %808 = vmatpush.msra.mxu0 %v788
        %809 = vmatpush.msra.mxu0 %v780
        %810 = vmatpush.msra.mxu0 %v772
        %811 = vmatpush.msra.mxu0 %v764
        %812 = vmatpush.msra.mxu0 %v756
        %813 = vmatpush.msra.mxu0 %v748
        %814 = vmatpush.msra.mxu0 %v740
        %815 = vmatpush.msra.mxu0 %v732
        %816 = vmatmul.f32.gmra.mxu0 %v798
        %v817 = vpop.f32.mrf.mxu0
        %v818 = vadd.f32 0.0, %v817
        %819 = vdwg.mxu0
        %820 = vmatpush.msra.mxu0 0.0
        %821 = vmatpush.msra.mxu0 0.0
        %822 = vmatpush.msra.mxu0 0.0
        %823 = vmatpush.msra.mxu0 0.0
        %824 = vmatpush.msra.mxu0 0.0
        %825 = vmatpush.msra.mxu0 0.0
        %826 = vmatpush.msra.mxu0 0.0
        %827 = vmatpush.msra.mxu0 0.0
        %828 = vmatpush.msra.mxu0 %v789
        %829 = vmatpush.msra.mxu0 %v781
        %830 = vmatpush.msra.mxu0 %v773
        %831 = vmatpush.msra.mxu0 %v765
        %832 = vmatpush.msra.mxu0 %v757
        %833 = vmatpush.msra.mxu0 %v749
        %834 = vmatpush.msra.mxu0 %v741
        %835 = vmatpush.msra.mxu0 %v733
        %836 = vmatmul.f32.gmra.mxu0 %v798
        %v837 = vpop.f32.mrf.mxu0
        %v838 = vadd.f32 0.0, %v837
        %839 = vdwg.mxu0
        %840 = vmatpush.msra.mxu0 0.0
        %841 = vmatpush.msra.mxu0 0.0
        %842 = vmatpush.msra.mxu0 0.0
        %843 = vmatpush.msra.mxu0 0.0
        %844 = vmatpush.msra.mxu0 0.0
        %845 = vmatpush.msra.mxu0 0.0
        %846 = vmatpush.msra.mxu0 0.0
        %847 = vmatpush.msra.mxu0 0.0
        %848 = vmatpush.msra.mxu0 %v790
        %849 = vmatpush.msra.mxu0 %v782
        %850 = vmatpush.msra.mxu0 %v774
        %851 = vmatpush.msra.mxu0 %v766
        %852 = vmatpush.msra.mxu0 %v758
        %853 = vmatpush.msra.mxu0 %v750
        %854 = vmatpush.msra.mxu0 %v742
        %855 = vmatpush.msra.mxu0 %v734
        %856 = vmatmul.f32.gmra.mxu0 %v798
        %v857 = vpop.f32.mrf.mxu0
        %v858 = vadd.f32 0.0, %v857
        %859 = vdwg.mxu0
        %860 = vmatpush.msra.mxu0 0.0
        %861 = vmatpush.msra.mxu0 0.0
        %862 = vmatpush.msra.mxu0 0.0
        %863 = vmatpush.msra.mxu0 0.0
        %864 = vmatpush.msra.mxu0 0.0
        %865 = vmatpush.msra.mxu0 0.0
        %866 = vmatpush.msra.mxu0 0.0
        %867 = vmatpush.msra.mxu0 0.0
        %868 = vmatpush.msra.mxu0 %v791
        %869 = vmatpush.msra.mxu0 %v783
        %870 = vmatpush.msra.mxu0 %v775
        %871 = vmatpush.msra.mxu0 %v767
        %872 = vmatpush.msra.mxu0 %v759
        %873 = vmatpush.msra.mxu0 %v751
        %874 = vmatpush.msra.mxu0 %v743
        %875 = vmatpush.msra.mxu0 %v735
        %876 = vmatmul.f32.gmra.mxu0 %v798
        %v877 = vpop.f32.mrf.mxu0
        %v878 = vadd.f32 0.0, %v877
        %879 = vdwg.mxu0
        %880 = vmatpush.msra.mxu0 0.0
        %881 = vmatpush.msra.mxu0 0.0
        %882 = vmatpush.msra.mxu0 0.0
        %883 = vmatpush.msra.mxu0 0.0
        %884 = vmatpush.msra.mxu0 0.0
        %885 = vmatpush.msra.mxu0 0.0
        %886 = vmatpush.msra.mxu0 0.0
        %887 = vmatpush.msra.mxu0 0.0
        %888 = vmatpush.msra.mxu0 %v792
        %889 = vmatpush.msra.mxu0 %v784
        %890 = vmatpush.msra.mxu0 %v776
        %891 = vmatpush.msra.mxu0 %v768
        %892 = vmatpush.msra.mxu0 %v760
        %893 = vmatpush.msra.mxu0 %v752
        %894 = vmatpush.msra.mxu0 %v744
        %895 = vmatpush.msra.mxu0 %v736
        %896 = vmatmul.f32.gmra.mxu0 %v798
        %v897 = vpop.f32.mrf.mxu0
        %v898 = vadd.f32 0.0, %v897
        %899 = vdwg.mxu0
        %900 = vmatpush.msra.mxu0 0.0
        %901 = vmatpush.msra.mxu0 0.0
        %902 = vmatpush.msra.mxu0 0.0
        %903 = vmatpush.msra.mxu0 0.0
        %904 = vmatpush.msra.mxu0 0.0
        %905 = vmatpush.msra.mxu0 0.0
        %906 = vmatpush.msra.mxu0 0.0
        %907 = vmatpush.msra.mxu0 0.0
        %908 = vmatpush.msra.mxu0 %v793
        %909 = vmatpush.msra.mxu0 %v785
        %910 = vmatpush.msra.mxu0 %v777
        %911 = vmatpush.msra.mxu0 %v769
        %912 = vmatpush.msra.mxu0 %v761
        %913 = vmatpush.msra.mxu0 %v753
        %914 = vmatpush.msra.mxu0 %v745
        %915 = vmatpush.msra.mxu0 %v737
        %916 = vmatmul.f32.gmra.mxu0 %v798
        %v917 = vpop.f32.mrf.mxu0
        %v918 = vadd.f32 0.0, %v917
        %919 = vdwg.mxu0
        %920 = vmatpush.msra.mxu0 0.0
        %921 = vmatpush.msra.mxu0 0.0
        %922 = vmatpush.msra.mxu0 0.0
        %923 = vmatpush.msra.mxu0 0.0
        %924 = vmatpush.msra.mxu0 0.0
        %925 = vmatpush.msra.mxu0 0.0
        %926 = vmatpush.msra.mxu0 0.0
        %927 = vmatpush.msra.mxu0 0.0
        %928 = vmatpush.msra.mxu0 %v794
        %929 = vmatpush.msra.mxu0 %v786
        %930 = vmatpush.msra.mxu0 %v778
        %931 = vmatpush.msra.mxu0 %v770
        %932 = vmatpush.msra.mxu0 %v762
        %933 = vmatpush.msra.mxu0 %v754
        %934 = vmatpush.msra.mxu0 %v746
        %935 = vmatpush.msra.mxu0 %v738
        %936 = vmatmul.f32.gmra.mxu0 %v798
        %v937 = vpop.f32.mrf.mxu0
        %v938 = vadd.f32 0.0, %v937
        %939 = vdwg.mxu0
        %940 = vmatpush.msra.mxu0 0.0
        %941 = vmatpush.msra.mxu0 0.0
        %942 = vmatpush.msra.mxu0 0.0
        %943 = vmatpush.msra.mxu0 0.0
        %944 = vmatpush.msra.mxu0 0.0
        %945 = vmatpush.msra.mxu0 0.0
        %946 = vmatpush.msra.mxu0 0.0
        %947 = vmatpush.msra.mxu0 0.0
        %948 = vmatpush.msra.mxu0 %v795
        %949 = vmatpush.msra.mxu0 %v787
        %950 = vmatpush.msra.mxu0 %v779
        %951 = vmatpush.msra.mxu0 %v771
        %952 = vmatpush.msra.mxu0 %v763
        %953 = vmatpush.msra.mxu0 %v755
        %954 = vmatpush.msra.mxu0 %v747
        %955 = vmatpush.msra.mxu0 %v739
        %956 = vmatmul.f32.gmra.mxu0 %v798
        %v957 = vpop.f32.mrf.mxu0
        %v958 = vadd.f32 0.0, %v957
        %959 = vdwg.mxu0
        %v961 = vsel %vm796, %v393, 0
        %963 = vmatpush.msra.mxu0 0.0
        %964 = vmatpush.msra.mxu0 0.0
        %965 = vmatpush.msra.mxu0 0.0
        %966 = vmatpush.msra.mxu0 0.0
        %967 = vmatpush.msra.mxu0 0.0
        %968 = vmatpush.msra.mxu0 0.0
        %969 = vmatpush.msra.mxu0 0.0
        %970 = vmatpush.msra.mxu0 0.0
        %971 = vmatpush.msra.mxu0 %v586
        %972 = vmatpush.msra.mxu0 %v578
        %973 = vmatpush.msra.mxu0 %v570
        %974 = vmatpush.msra.mxu0 %v562
        %975 = vmatpush.msra.mxu0 %v554
        %976 = vmatpush.msra.mxu0 %v546
        %977 = vmatpush.msra.mxu0 %v538
        %978 = vmatpush.msra.mxu0 %v530
        %979 = vmatmul.f32.gmra.mxu0 %v961
        %v980 = vpop.f32.mrf.mxu0
        %v981 = vadd.f32 %v818, %v980
        %982 = vdwg.mxu0
        %983 = vmatpush.msra.mxu0 0.0
        %984 = vmatpush.msra.mxu0 0.0
        %985 = vmatpush.msra.mxu0 0.0
        %986 = vmatpush.msra.mxu0 0.0
        %987 = vmatpush.msra.mxu0 0.0
        %988 = vmatpush.msra.mxu0 0.0
        %989 = vmatpush.msra.mxu0 0.0
        %990 = vmatpush.msra.mxu0 0.0
        %991 = vmatpush.msra.mxu0 %v587
        %992 = vmatpush.msra.mxu0 %v579
        %993 = vmatpush.msra.mxu0 %v571
        %994 = vmatpush.msra.mxu0 %v563
        %995 = vmatpush.msra.mxu0 %v555
        %996 = vmatpush.msra.mxu0 %v547
        %997 = vmatpush.msra.mxu0 %v539
        %998 = vmatpush.msra.mxu0 %v531
        %999 = vmatmul.f32.gmra.mxu0 %v961
        %v1000 = vpop.f32.mrf.mxu0
        %v1001 = vadd.f32 %v838, %v1000
        %1002 = vdwg.mxu0
        %1003 = vmatpush.msra.mxu0 0.0
        %1004 = vmatpush.msra.mxu0 0.0
        %1005 = vmatpush.msra.mxu0 0.0
        %1006 = vmatpush.msra.mxu0 0.0
        %1007 = vmatpush.msra.mxu0 0.0
        %1008 = vmatpush.msra.mxu0 0.0
        %1009 = vmatpush.msra.mxu0 0.0
        %1010 = vmatpush.msra.mxu0 0.0
        %1011 = vmatpush.msra.mxu0 %v588
        %1012 = vmatpush.msra.mxu0 %v580
        %1013 = vmatpush.msra.mxu0 %v572
        %1014 = vmatpush.msra.mxu0 %v564
        %1015 = vmatpush.msra.mxu0 %v556
        %1016 = vmatpush.msra.mxu0 %v548
        %1017 = vmatpush.msra.mxu0 %v540
        %1018 = vmatpush.msra.mxu0 %v532
        %1019 = vmatmul.f32.gmra.mxu0 %v961
        %v1020 = vpop.f32.mrf.mxu0
        %v1021 = vadd.f32 %v858, %v1020
        %1022 = vdwg.mxu0
        %1023 = vmatpush.msra.mxu0 0.0
        %1024 = vmatpush.msra.mxu0 0.0
        %1025 = vmatpush.msra.mxu0 0.0
        %1026 = vmatpush.msra.mxu0 0.0
        %1027 = vmatpush.msra.mxu0 0.0
        %1028 = vmatpush.msra.mxu0 0.0
        %1029 = vmatpush.msra.mxu0 0.0
        %1030 = vmatpush.msra.mxu0 0.0
        %1031 = vmatpush.msra.mxu0 %v589
        %1032 = vmatpush.msra.mxu0 %v581
        %1033 = vmatpush.msra.mxu0 %v573
        %1034 = vmatpush.msra.mxu0 %v565
        %1035 = vmatpush.msra.mxu0 %v557
        %1036 = vmatpush.msra.mxu0 %v549
        %1037 = vmatpush.msra.mxu0 %v541
        %1038 = vmatpush.msra.mxu0 %v533
        %1039 = vmatmul.f32.gmra.mxu0 %v961
        %v1040 = vpop.f32.mrf.mxu0
        %v1041 = vadd.f32 %v878, %v1040
        %1042 = vdwg.mxu0
        %1043 = vmatpush.msra.mxu0 0.0
        %1044 = vmatpush.msra.mxu0 0.0
        %1045 = vmatpush.msra.mxu0 0.0
        %1046 = vmatpush.msra.mxu0 0.0
        %1047 = vmatpush.msra.mxu0 0.0
        %1048 = vmatpush.msra.mxu0 0.0
        %1049 = vmatpush.msra.mxu0 0.0
        %1050 = vmatpush.msra.mxu0 0.0
        %1051 = vmatpush.msra.mxu0 %v590
        %1052 = vmatpush.msra.mxu0 %v582
        %1053 = vmatpush.msra.mxu0 %v574
        %1054 = vmatpush.msra.mxu0 %v566
        %1055 = vmatpush.msra.mxu0 %v558
        %1056 = vmatpush.msra.mxu0 %v550
        %1057 = vmatpush.msra.mxu0 %v542
        %1058 = vmatpush.msra.mxu0 %v534
        %1059 = vmatmul.f32.gmra.mxu0 %v961
        %v1060 = vpop.f32.mrf.mxu0
        %v1061 = vadd.f32 %v898, %v1060
        %1062 = vdwg.mxu0
        %1063 = vmatpush.msra.mxu0 0.0
        %1064 = vmatpush.msra.mxu0 0.0
        %1065 = vmatpush.msra.mxu0 0.0
        %1066 = vmatpush.msra.mxu0 0.0
        %1067 = vmatpush.msra.mxu0 0.0
        %1068 = vmatpush.msra.mxu0 0.0
        %1069 = vmatpush.msra.mxu0 0.0
        %1070 = vmatpush.msra.mxu0 0.0
        %1071 = vmatpush.msra.mxu0 %v591
        %1072 = vmatpush.msra.mxu0 %v583
        %1073 = vmatpush.msra.mxu0 %v575
        %1074 = vmatpush.msra.mxu0 %v567
        %1075 = vmatpush.msra.mxu0 %v559
        %1076 = vmatpush.msra.mxu0 %v551
        %1077 = vmatpush.msra.mxu0 %v543
        %1078 = vmatpush.msra.mxu0 %v535
        %1079 = vmatmul.f32.gmra.mxu0 %v961
        %v1080 = vpop.f32.mrf.mxu0
        %v1081 = vadd.f32 %v918, %v1080
        %1082 = vdwg.mxu0
        %1083 = vmatpush.msra.mxu0 0.0
        %1084 = vmatpush.msra.mxu0 0.0
        %1085 = vmatpush.msra.mxu0 0.0
        %1086 = vmatpush.msra.mxu0 0.0
        %1087 = vmatpush.msra.mxu0 0.0
        %1088 = vmatpush.msra.mxu0 0.0
        %1089 = vmatpush.msra.mxu0 0.0
        %1090 = vmatpush.msra.mxu0 0.0
        %1091 = vmatpush.msra.mxu0 %v592
        %1092 = vmatpush.msra.mxu0 %v584
        %1093 = vmatpush.msra.mxu0 %v576
        %1094 = vmatpush.msra.mxu0 %v568
        %1095 = vmatpush.msra.mxu0 %v560
        %1096 = vmatpush.msra.mxu0 %v552
        %1097 = vmatpush.msra.mxu0 %v544
        %1098 = vmatpush.msra.mxu0 %v536
        %1099 = vmatmul.f32.gmra.mxu0 %v961
        %v1100 = vpop.f32.mrf.mxu0
        %v1101 = vadd.f32 %v938, %v1100
        %1102 = vdwg.mxu0
        %1103 = vmatpush.msra.mxu0 0.0
        %1104 = vmatpush.msra.mxu0 0.0
        %1105 = vmatpush.msra.mxu0 0.0
        %1106 = vmatpush.msra.mxu0 0.0
        %1107 = vmatpush.msra.mxu0 0.0
        %1108 = vmatpush.msra.mxu0 0.0
        %1109 = vmatpush.msra.mxu0 0.0
        %1110 = vmatpush.msra.mxu0 0.0
        %1111 = vmatpush.msra.mxu0 %v593
        %1112 = vmatpush.msra.mxu0 %v585
        %1113 = vmatpush.msra.mxu0 %v577
        %1114 = vmatpush.msra.mxu0 %v569
        %1115 = vmatpush.msra.mxu0 %v561
        %1116 = vmatpush.msra.mxu0 %v553
        %1117 = vmatpush.msra.mxu0 %v545
        %1118 = vmatpush.msra.mxu0 %v537
        %1119 = vmatmul.f32.gmra.mxu0 %v961
        %v1120 = vpop.f32.mrf.mxu0
        %v1121 = vadd.f32 %v958, %v1120
        %1122 = vdwg.mxu0
        %s1123 = scalar_lea.vmem [#allocation2], 16
        %v1124 = vld [vmem:[%s1123] sm:$0xff]
        %v1125 = vperm.slane %v376, 2
        %v1126 = vperm.slane %v377, 2
        %v1127 = vperm.slane %v378, 2
        %v1128 = vperm.slane %v379, 2
        %v1129 = vperm.slane %v380, 2
        %v1130 = vperm.slane %v381, 2
        %v1131 = vperm.slane %v382, 2
        %v1132 = vperm.slane %v383, 2
        %vm1133 = vcmp.eq.s32.totalorder %v385, %v1125
        %vm1134 = vcmp.eq.s32.totalorder %v385, %v1126
        %vm1135 = vcmp.eq.s32.totalorder %v385, %v1127
        %vm1136 = vcmp.eq.s32.totalorder %v385, %v1128
        %vm1137 = vcmp.eq.s32.totalorder %v385, %v1129
        %vm1138 = vcmp.eq.s32.totalorder %v385, %v1130
        %vm1139 = vcmp.eq.s32.totalorder %v385, %v1131
        %vm1140 = vcmp.eq.s32.totalorder %v385, %v1132
        %vm1141 = vcmp.eq.s32.totalorder %v386, %v1125
        %vm1142 = vcmp.eq.s32.totalorder %v386, %v1126
        %vm1143 = vcmp.eq.s32.totalorder %v386, %v1127
        %vm1144 = vcmp.eq.s32.totalorder %v386, %v1128
        %vm1145 = vcmp.eq.s32.totalorder %v386, %v1129
        %vm1146 = vcmp.eq.s32.totalorder %v386, %v1130
        %vm1147 = vcmp.eq.s32.totalorder %v386, %v1131
        %vm1148 = vcmp.eq.s32.totalorder %v386, %v1132
        %vm1149 = vcmp.eq.s32.totalorder %v387, %v1125
        %vm1150 = vcmp.eq.s32.totalorder %v387, %v1126
        %vm1151 = vcmp.eq.s32.totalorder %v387, %v1127
        %vm1152 = vcmp.eq.s32.totalorder %v387, %v1128
        %vm1153 = vcmp.eq.s32.totalorder %v387, %v1129
        %vm1154 = vcmp.eq.s32.totalorder %v387, %v1130
        %vm1155 = vcmp.eq.s32.totalorder %v387, %v1131
        %vm1156 = vcmp.eq.s32.totalorder %v387, %v1132
        %vm1157 = vcmp.eq.s32.totalorder %v388, %v1125
        %vm1158 = vcmp.eq.s32.totalorder %v388, %v1126
        %vm1159 = vcmp.eq.s32.totalorder %v388, %v1127
        %vm1160 = vcmp.eq.s32.totalorder %v388, %v1128
        %vm1161 = vcmp.eq.s32.totalorder %v388, %v1129
        %vm1162 = vcmp.eq.s32.totalorder %v388, %v1130
        %vm1163 = vcmp.eq.s32.totalorder %v388, %v1131
        %vm1164 = vcmp.eq.s32.totalorder %v388, %v1132
        %vm1165 = vcmp.eq.s32.totalorder %v389, %v1125
        %vm1166 = vcmp.eq.s32.totalorder %v389, %v1126
        %vm1167 = vcmp.eq.s32.totalorder %v389, %v1127
        %vm1168 = vcmp.eq.s32.totalorder %v389, %v1128
        %vm1169 = vcmp.eq.s32.totalorder %v389, %v1129
        %vm1170 = vcmp.eq.s32.totalorder %v389, %v1130
        %vm1171 = vcmp.eq.s32.totalorder %v389, %v1131
        %vm1172 = vcmp.eq.s32.totalorder %v389, %v1132
        %vm1173 = vcmp.eq.s32.totalorder %v390, %v1125
        %vm1174 = vcmp.eq.s32.totalorder %v390, %v1126
        %vm1175 = vcmp.eq.s32.totalorder %v390, %v1127
        %vm1176 = vcmp.eq.s32.totalorder %v390, %v1128
        %vm1177 = vcmp.eq.s32.totalorder %v390, %v1129
        %vm1178 = vcmp.eq.s32.totalorder %v390, %v1130
        %vm1179 = vcmp.eq.s32.totalorder %v390, %v1131
        %vm1180 = vcmp.eq.s32.totalorder %v390, %v1132
        %vm1181 = vcmp.eq.s32.totalorder %v391, %v1125
        %vm1182 = vcmp.eq.s32.totalorder %v391, %v1126
        %vm1183 = vcmp.eq.s32.totalorder %v391, %v1127
        %vm1184 = vcmp.eq.s32.totalorder %v391, %v1128
        %vm1185 = vcmp.eq.s32.totalorder %v391, %v1129
        %vm1186 = vcmp.eq.s32.totalorder %v391, %v1130
        %vm1187 = vcmp.eq.s32.totalorder %v391, %v1131
        %vm1188 = vcmp.eq.s32.totalorder %v391, %v1132
        %vm1189 = vcmp.eq.s32.totalorder %v392, %v1125
        %vm1190 = vcmp.eq.s32.totalorder %v392, %v1126
        %vm1191 = vcmp.eq.s32.totalorder %v392, %v1127
        %vm1192 = vcmp.eq.s32.totalorder %v392, %v1128
        %vm1193 = vcmp.eq.s32.totalorder %v392, %v1129
        %vm1194 = vcmp.eq.s32.totalorder %v392, %v1130
        %vm1195 = vcmp.eq.s32.totalorder %v392, %v1131
        %vm1196 = vcmp.eq.s32.totalorder %v392, %v1132
        %v1197 = vsel %vm1133, 1, 0
        %v1198 = vsel %vm1134, 1, 0
        %v1199 = vsel %vm1135, 1, 0
        %v1200 = vsel %vm1136, 1, 0
        %v1201 = vsel %vm1137, 1, 0
        %v1202 = vsel %vm1138, 1, 0
        %v1203 = vsel %vm1139, 1, 0
        %v1204 = vsel %vm1140, 1, 0
        %v1205 = vsel %vm1141, 1, 0
        %v1206 = vsel %vm1142, 1, 0
        %v1207 = vsel %vm1143, 1, 0
        %v1208 = vsel %vm1144, 1, 0
        %v1209 = vsel %vm1145, 1, 0
        %v1210 = vsel %vm1146, 1, 0
        %v1211 = vsel %vm1147, 1, 0
        %v1212 = vsel %vm1148, 1, 0
        %v1213 = vsel %vm1149, 1, 0
        %v1214 = vsel %vm1150, 1, 0
        %v1215 = vsel %vm1151, 1, 0
        %v1216 = vsel %vm1152, 1, 0
        %v1217 = vsel %vm1153, 1, 0
        %v1218 = vsel %vm1154, 1, 0
        %v1219 = vsel %vm1155, 1, 0
        %v1220 = vsel %vm1156, 1, 0
        %v1221 = vsel %vm1157, 1, 0
        %v1222 = vsel %vm1158, 1, 0
        %v1223 = vsel %vm1159, 1, 0
        %v1224 = vsel %vm1160, 1, 0
        %v1225 = vsel %vm1161, 1, 0
        %v1226 = vsel %vm1162, 1, 0
        %v1227 = vsel %vm1163, 1, 0
        %v1228 = vsel %vm1164, 1, 0
        %v1229 = vsel %vm1165, 1, 0
        %v1230 = vsel %vm1166, 1, 0
        %v1231 = vsel %vm1167, 1, 0
        %v1232 = vsel %vm1168, 1, 0
        %v1233 = vsel %vm1169, 1, 0
        %v1234 = vsel %vm1170, 1, 0
        %v1235 = vsel %vm1171, 1, 0
        %v1236 = vsel %vm1172, 1, 0
        %v1237 = vsel %vm1173, 1, 0
        %v1238 = vsel %vm1174, 1, 0
        %v1239 = vsel %vm1175, 1, 0
        %v1240 = vsel %vm1176, 1, 0
        %v1241 = vsel %vm1177, 1, 0
        %v1242 = vsel %vm1178, 1, 0
        %v1243 = vsel %vm1179, 1, 0
        %v1244 = vsel %vm1180, 1, 0
        %v1245 = vsel %vm1181, 1, 0
        %v1246 = vsel %vm1182, 1, 0
        %v1247 = vsel %vm1183, 1, 0
        %v1248 = vsel %vm1184, 1, 0
        %v1249 = vsel %vm1185, 1, 0
        %v1250 = vsel %vm1186, 1, 0
        %v1251 = vsel %vm1187, 1, 0
        %v1252 = vsel %vm1188, 1, 0
        %v1253 = vsel %vm1189, 1, 0
        %v1254 = vsel %vm1190, 1, 0
        %v1255 = vsel %vm1191, 1, 0
        %v1256 = vsel %vm1192, 1, 0
        %v1257 = vsel %vm1193, 1, 0
        %v1258 = vsel %vm1194, 1, 0
        %v1259 = vsel %vm1195, 1, 0
        %v1260 = vsel %vm1196, 1, 0
        %v1261 = vcvt.s32.f32 %v1197
        %v1262 = vcvt.s32.f32 %v1198
        %v1263 = vcvt.s32.f32 %v1199
        %v1264 = vcvt.s32.f32 %v1200
        %v1265 = vcvt.s32.f32 %v1201
        %v1266 = vcvt.s32.f32 %v1202
        %v1267 = vcvt.s32.f32 %v1203
        %v1268 = vcvt.s32.f32 %v1204
        %v1269 = vcvt.s32.f32 %v1205
        %v1270 = vcvt.s32.f32 %v1206
        %v1271 = vcvt.s32.f32 %v1207
        %v1272 = vcvt.s32.f32 %v1208
        %v1273 = vcvt.s32.f32 %v1209
        %v1274 = vcvt.s32.f32 %v1210
        %v1275 = vcvt.s32.f32 %v1211
        %v1276 = vcvt.s32.f32 %v1212
        %v1277 = vcvt.s32.f32 %v1213
        %v1278 = vcvt.s32.f32 %v1214
        %v1279 = vcvt.s32.f32 %v1215
        %v1280 = vcvt.s32.f32 %v1216
        %v1281 = vcvt.s32.f32 %v1217
        %v1282 = vcvt.s32.f32 %v1218
        %v1283 = vcvt.s32.f32 %v1219
        %v1284 = vcvt.s32.f32 %v1220
        %v1285 = vcvt.s32.f32 %v1221
        %v1286 = vcvt.s32.f32 %v1222
        %v1287 = vcvt.s32.f32 %v1223
        %v1288 = vcvt.s32.f32 %v1224
        %v1289 = vcvt.s32.f32 %v1225
        %v1290 = vcvt.s32.f32 %v1226
        %v1291 = vcvt.s32.f32 %v1227
        %v1292 = vcvt.s32.f32 %v1228
        %v1293 = vcvt.s32.f32 %v1229
        %v1294 = vcvt.s32.f32 %v1230
        %v1295 = vcvt.s32.f32 %v1231
        %v1296 = vcvt.s32.f32 %v1232
        %v1297 = vcvt.s32.f32 %v1233
        %v1298 = vcvt.s32.f32 %v1234
        %v1299 = vcvt.s32.f32 %v1235
        %v1300 = vcvt.s32.f32 %v1236
        %v1301 = vcvt.s32.f32 %v1237
        %v1302 = vcvt.s32.f32 %v1238
        %v1303 = vcvt.s32.f32 %v1239
        %v1304 = vcvt.s32.f32 %v1240
        %v1305 = vcvt.s32.f32 %v1241
        %v1306 = vcvt.s32.f32 %v1242
        %v1307 = vcvt.s32.f32 %v1243
        %v1308 = vcvt.s32.f32 %v1244
        %v1309 = vcvt.s32.f32 %v1245
        %v1310 = vcvt.s32.f32 %v1246
        %v1311 = vcvt.s32.f32 %v1247
        %v1312 = vcvt.s32.f32 %v1248
        %v1313 = vcvt.s32.f32 %v1249
        %v1314 = vcvt.s32.f32 %v1250
        %v1315 = vcvt.s32.f32 %v1251
        %v1316 = vcvt.s32.f32 %v1252
        %v1317 = vcvt.s32.f32 %v1253
        %v1318 = vcvt.s32.f32 %v1254
        %v1319 = vcvt.s32.f32 %v1255
        %v1320 = vcvt.s32.f32 %v1256
        %v1321 = vcvt.s32.f32 %v1257
        %v1322 = vcvt.s32.f32 %v1258
        %v1323 = vcvt.s32.f32 %v1259
        %v1324 = vcvt.s32.f32 %v1260
        %v1326 = vsel %vm796, %v1124, 0
        %1328 = vmatpush.msra.mxu0 0.0
        %1329 = vmatpush.msra.mxu0 0.0
        %1330 = vmatpush.msra.mxu0 0.0
        %1331 = vmatpush.msra.mxu0 0.0
        %1332 = vmatpush.msra.mxu0 0.0
        %1333 = vmatpush.msra.mxu0 0.0
        %1334 = vmatpush.msra.mxu0 0.0
        %1335 = vmatpush.msra.mxu0 0.0
        %1336 = vmatpush.msra.mxu0 %v1317
        %1337 = vmatpush.msra.mxu0 %v1309
        %1338 = vmatpush.msra.mxu0 %v1301
        %1339 = vmatpush.msra.mxu0 %v1293
        %1340 = vmatpush.msra.mxu0 %v1285
        %1341 = vmatpush.msra.mxu0 %v1277
        %1342 = vmatpush.msra.mxu0 %v1269
        %1343 = vmatpush.msra.mxu0 %v1261
        %1344 = vmatmul.f32.gmra.mxu0 %v1326
        %v1345 = vpop.f32.mrf.mxu0
        %v1346 = vadd.f32 0.0, %v1345
        %1347 = vdwg.mxu0
        %1348 = vmatpush.msra.mxu0 0.0
        %1349 = vmatpush.msra.mxu0 0.0
        %1350 = vmatpush.msra.mxu0 0.0
        %1351 = vmatpush.msra.mxu0 0.0
        %1352 = vmatpush.msra.mxu0 0.0
        %1353 = vmatpush.msra.mxu0 0.0
        %1354 = vmatpush.msra.mxu0 0.0
        %1355 = vmatpush.msra.mxu0 0.0
        %1356 = vmatpush.msra.mxu0 %v1318
        %1357 = vmatpush.msra.mxu0 %v1310
        %1358 = vmatpush.msra.mxu0 %v1302
        %1359 = vmatpush.msra.mxu0 %v1294
        %1360 = vmatpush.msra.mxu0 %v1286
        %1361 = vmatpush.msra.mxu0 %v1278
        %1362 = vmatpush.msra.mxu0 %v1270
        %1363 = vmatpush.msra.mxu0 %v1262
        %1364 = vmatmul.f32.gmra.mxu0 %v1326
        %v1365 = vpop.f32.mrf.mxu0
        %v1366 = vadd.f32 0.0, %v1365
        %1367 = vdwg.mxu0
        %1368 = vmatpush.msra.mxu0 0.0
        %1369 = vmatpush.msra.mxu0 0.0
        %1370 = vmatpush.msra.mxu0 0.0
        %1371 = vmatpush.msra.mxu0 0.0
        %1372 = vmatpush.msra.mxu0 0.0
        %1373 = vmatpush.msra.mxu0 0.0
        %1374 = vmatpush.msra.mxu0 0.0
        %1375 = vmatpush.msra.mxu0 0.0
        %1376 = vmatpush.msra.mxu0 %v1319
        %1377 = vmatpush.msra.mxu0 %v1311
        %1378 = vmatpush.msra.mxu0 %v1303
        %1379 = vmatpush.msra.mxu0 %v1295
        %1380 = vmatpush.msra.mxu0 %v1287
        %1381 = vmatpush.msra.mxu0 %v1279
        %1382 = vmatpush.msra.mxu0 %v1271
        %1383 = vmatpush.msra.mxu0 %v1263
        %1384 = vmatmul.f32.gmra.mxu0 %v1326
        %v1385 = vpop.f32.mrf.mxu0
        %v1386 = vadd.f32 0.0, %v1385
        %1387 = vdwg.mxu0
        %1388 = vmatpush.msra.mxu0 0.0
        %1389 = vmatpush.msra.mxu0 0.0
        %1390 = vmatpush.msra.mxu0 0.0
        %1391 = vmatpush.msra.mxu0 0.0
        %1392 = vmatpush.msra.mxu0 0.0
        %1393 = vmatpush.msra.mxu0 0.0
        %1394 = vmatpush.msra.mxu0 0.0
        %1395 = vmatpush.msra.mxu0 0.0
        %1396 = vmatpush.msra.mxu0 %v1320
        %1397 = vmatpush.msra.mxu0 %v1312
        %1398 = vmatpush.msra.mxu0 %v1304
        %1399 = vmatpush.msra.mxu0 %v1296
        %1400 = vmatpush.msra.mxu0 %v1288
        %1401 = vmatpush.msra.mxu0 %v1280
        %1402 = vmatpush.msra.mxu0 %v1272
        %1403 = vmatpush.msra.mxu0 %v1264
        %1404 = vmatmul.f32.gmra.mxu0 %v1326
        %v1405 = vpop.f32.mrf.mxu0
        %v1406 = vadd.f32 0.0, %v1405
        %1407 = vdwg.mxu0
        %1408 = vmatpush.msra.mxu0 0.0
        %1409 = vmatpush.msra.mxu0 0.0
        %1410 = vmatpush.msra.mxu0 0.0
        %1411 = vmatpush.msra.mxu0 0.0
        %1412 = vmatpush.msra.mxu0 0.0
        %1413 = vmatpush.msra.mxu0 0.0
        %1414 = vmatpush.msra.mxu0 0.0
        %1415 = vmatpush.msra.mxu0 0.0
        %1416 = vmatpush.msra.mxu0 %v1321
        %1417 = vmatpush.msra.mxu0 %v1313
        %1418 = vmatpush.msra.mxu0 %v1305
        %1419 = vmatpush.msra.mxu0 %v1297
        %1420 = vmatpush.msra.mxu0 %v1289
        %1421 = vmatpush.msra.mxu0 %v1281
        %1422 = vmatpush.msra.mxu0 %v1273
        %1423 = vmatpush.msra.mxu0 %v1265
        %1424 = vmatmul.f32.gmra.mxu0 %v1326
        %v1425 = vpop.f32.mrf.mxu0
        %v1426 = vadd.f32 0.0, %v1425
        %1427 = vdwg.mxu0
        %1428 = vmatpush.msra.mxu0 0.0
        %1429 = vmatpush.msra.mxu0 0.0
        %1430 = vmatpush.msra.mxu0 0.0
        %1431 = vmatpush.msra.mxu0 0.0
        %1432 = vmatpush.msra.mxu0 0.0
        %1433 = vmatpush.msra.mxu0 0.0
        %1434 = vmatpush.msra.mxu0 0.0
        %1435 = vmatpush.msra.mxu0 0.0
        %1436 = vmatpush.msra.mxu0 %v1322
        %1437 = vmatpush.msra.mxu0 %v1314
        %1438 = vmatpush.msra.mxu0 %v1306
        %1439 = vmatpush.msra.mxu0 %v1298
        %1440 = vmatpush.msra.mxu0 %v1290
        %1441 = vmatpush.msra.mxu0 %v1282
        %1442 = vmatpush.msra.mxu0 %v1274
        %1443 = vmatpush.msra.mxu0 %v1266
        %1444 = vmatmul.f32.gmra.mxu0 %v1326
        %v1445 = vpop.f32.mrf.mxu0
        %v1446 = vadd.f32 0.0, %v1445
        %1447 = vdwg.mxu0
        %1448 = vmatpush.msra.mxu0 0.0
        %1449 = vmatpush.msra.mxu0 0.0
        %1450 = vmatpush.msra.mxu0 0.0
        %1451 = vmatpush.msra.mxu0 0.0
        %1452 = vmatpush.msra.mxu0 0.0
        %1453 = vmatpush.msra.mxu0 0.0
        %1454 = vmatpush.msra.mxu0 0.0
        %1455 = vmatpush.msra.mxu0 0.0
        %1456 = vmatpush.msra.mxu0 %v1323
        %1457 = vmatpush.msra.mxu0 %v1315
        %1458 = vmatpush.msra.mxu0 %v1307
        %1459 = vmatpush.msra.mxu0 %v1299
        %1460 = vmatpush.msra.mxu0 %v1291
        %1461 = vmatpush.msra.mxu0 %v1283
        %1462 = vmatpush.msra.mxu0 %v1275
        %1463 = vmatpush.msra.mxu0 %v1267
        %1464 = vmatmul.f32.gmra.mxu0 %v1326
        %v1465 = vpop.f32.mrf.mxu0
        %v1466 = vadd.f32 0.0, %v1465
        %1467 = vdwg.mxu0
        %1468 = vmatpush.msra.mxu0 0.0
        %1469 = vmatpush.msra.mxu0 0.0
        %1470 = vmatpush.msra.mxu0 0.0
        %1471 = vmatpush.msra.mxu0 0.0
        %1472 = vmatpush.msra.mxu0 0.0
        %1473 = vmatpush.msra.mxu0 0.0
        %1474 = vmatpush.msra.mxu0 0.0
        %1475 = vmatpush.msra.mxu0 0.0
        %1476 = vmatpush.msra.mxu0 %v1324
        %1477 = vmatpush.msra.mxu0 %v1316
        %1478 = vmatpush.msra.mxu0 %v1308
        %1479 = vmatpush.msra.mxu0 %v1300
        %1480 = vmatpush.msra.mxu0 %v1292
        %1481 = vmatpush.msra.mxu0 %v1284
        %1482 = vmatpush.msra.mxu0 %v1276
        %1483 = vmatpush.msra.mxu0 %v1268
        %1484 = vmatmul.f32.gmra.mxu0 %v1326
        %v1485 = vpop.f32.mrf.mxu0
        %v1486 = vadd.f32 0.0, %v1485
        %1487 = vdwg.mxu0
        %v1488 = vadd.f32 %v981, %v1346
        %v1489 = vadd.f32 %v1001, %v1366
        %v1490 = vadd.f32 %v1021, %v1386
        %v1491 = vadd.f32 %v1041, %v1406
        %v1492 = vadd.f32 %v1061, %v1426
        %v1493 = vadd.f32 %v1081, %v1446
        %v1494 = vadd.f32 %v1101, %v1466
        %v1495 = vadd.f32 %v1121, %v1486
        %s1496 = scalar_lea.vmem [#allocation2], 24
        %v1497 = vld [vmem:[%s1496] sm:$0xff]
        %v1498 = vperm.slane %v376, 3
        %v1499 = vperm.slane %v377, 3
        %v1500 = vperm.slane %v378, 3
        %v1501 = vperm.slane %v379, 3
        %v1502 = vperm.slane %v380, 3
        %v1503 = vperm.slane %v381, 3
        %v1504 = vperm.slane %v382, 3
        %v1505 = vperm.slane %v383, 3
        %vm1506 = vcmp.eq.s32.totalorder %v385, %v1498
        %vm1507 = vcmp.eq.s32.totalorder %v385, %v1499
        %vm1508 = vcmp.eq.s32.totalorder %v385, %v1500
        %vm1509 = vcmp.eq.s32.totalorder %v385, %v1501
        %vm1510 = vcmp.eq.s32.totalorder %v385, %v1502
        %vm1511 = vcmp.eq.s32.totalorder %v385, %v1503
        %vm1512 = vcmp.eq.s32.totalorder %v385, %v1504
        %vm1513 = vcmp.eq.s32.totalorder %v385, %v1505
        %vm1514 = vcmp.eq.s32.totalorder %v386, %v1498
        %vm1515 = vcmp.eq.s32.totalorder %v386, %v1499
        %vm1516 = vcmp.eq.s32.totalorder %v386, %v1500
        %vm1517 = vcmp.eq.s32.totalorder %v386, %v1501
        %vm1518 = vcmp.eq.s32.totalorder %v386, %v1502
        %vm1519 = vcmp.eq.s32.totalorder %v386, %v1503
        %vm1520 = vcmp.eq.s32.totalorder %v386, %v1504
        %vm1521 = vcmp.eq.s32.totalorder %v386, %v1505
        %vm1522 = vcmp.eq.s32.totalorder %v387, %v1498
        %vm1523 = vcmp.eq.s32.totalorder %v387, %v1499
        %vm1524 = vcmp.eq.s32.totalorder %v387, %v1500
        %vm1525 = vcmp.eq.s32.totalorder %v387, %v1501
        %vm1526 = vcmp.eq.s32.totalorder %v387, %v1502
        %vm1527 = vcmp.eq.s32.totalorder %v387, %v1503
        %vm1528 = vcmp.eq.s32.totalorder %v387, %v1504
        %vm1529 = vcmp.eq.s32.totalorder %v387, %v1505
        %vm1530 = vcmp.eq.s32.totalorder %v388, %v1498
        %vm1531 = vcmp.eq.s32.totalorder %v388, %v1499
        %vm1532 = vcmp.eq.s32.totalorder %v388, %v1500
        %vm1533 = vcmp.eq.s32.totalorder %v388, %v1501
        %vm1534 = vcmp.eq.s32.totalorder %v388, %v1502
        %vm1535 = vcmp.eq.s32.totalorder %v388, %v1503
        %vm1536 = vcmp.eq.s32.totalorder %v388, %v1504
        %vm1537 = vcmp.eq.s32.totalorder %v388, %v1505
        %vm1538 = vcmp.eq.s32.totalorder %v389, %v1498
        %vm1539 = vcmp.eq.s32.totalorder %v389, %v1499
        %vm1540 = vcmp.eq.s32.totalorder %v389, %v1500
        %vm1541 = vcmp.eq.s32.totalorder %v389, %v1501
        %vm1542 = vcmp.eq.s32.totalorder %v389, %v1502
        %vm1543 = vcmp.eq.s32.totalorder %v389, %v1503
        %vm1544 = vcmp.eq.s32.totalorder %v389, %v1504
        %vm1545 = vcmp.eq.s32.totalorder %v389, %v1505
        %vm1546 = vcmp.eq.s32.totalorder %v390, %v1498
        %vm1547 = vcmp.eq.s32.totalorder %v390, %v1499
        %vm1548 = vcmp.eq.s32.totalorder %v390, %v1500
        %vm1549 = vcmp.eq.s32.totalorder %v390, %v1501
        %vm1550 = vcmp.eq.s32.totalorder %v390, %v1502
        %vm1551 = vcmp.eq.s32.totalorder %v390, %v1503
        %vm1552 = vcmp.eq.s32.totalorder %v390, %v1504
        %vm1553 = vcmp.eq.s32.totalorder %v390, %v1505
        %vm1554 = vcmp.eq.s32.totalorder %v391, %v1498
        %vm1555 = vcmp.eq.s32.totalorder %v391, %v1499
        %vm1556 = vcmp.eq.s32.totalorder %v391, %v1500
        %vm1557 = vcmp.eq.s32.totalorder %v391, %v1501
        %vm1558 = vcmp.eq.s32.totalorder %v391, %v1502
        %vm1559 = vcmp.eq.s32.totalorder %v391, %v1503
        %vm1560 = vcmp.eq.s32.totalorder %v391, %v1504
        %vm1561 = vcmp.eq.s32.totalorder %v391, %v1505
        %vm1562 = vcmp.eq.s32.totalorder %v392, %v1498
        %vm1563 = vcmp.eq.s32.totalorder %v392, %v1499
        %vm1564 = vcmp.eq.s32.totalorder %v392, %v1500
        %vm1565 = vcmp.eq.s32.totalorder %v392, %v1501
        %vm1566 = vcmp.eq.s32.totalorder %v392, %v1502
        %vm1567 = vcmp.eq.s32.totalorder %v392, %v1503
        %vm1568 = vcmp.eq.s32.totalorder %v392, %v1504
        %vm1569 = vcmp.eq.s32.totalorder %v392, %v1505
        %v1570 = vsel %vm1506, 1, 0
        %v1571 = vsel %vm1507, 1, 0
        %v1572 = vsel %vm1508, 1, 0
        %v1573 = vsel %vm1509, 1, 0
        %v1574 = vsel %vm1510, 1, 0
        %v1575 = vsel %vm1511, 1, 0
        %v1576 = vsel %vm1512, 1, 0
        %v1577 = vsel %vm1513, 1, 0
        %v1578 = vsel %vm1514, 1, 0
        %v1579 = vsel %vm1515, 1, 0
        %v1580 = vsel %vm1516, 1, 0
        %v1581 = vsel %vm1517, 1, 0
        %v1582 = vsel %vm1518, 1, 0
        %v1583 = vsel %vm1519, 1, 0
        %v1584 = vsel %vm1520, 1, 0
        %v1585 = vsel %vm1521, 1, 0
        %v1586 = vsel %vm1522, 1, 0
        %v1587 = vsel %vm1523, 1, 0
        %v1588 = vsel %vm1524, 1, 0
        %v1589 = vsel %vm1525, 1, 0
        %v1590 = vsel %vm1526, 1, 0
        %v1591 = vsel %vm1527, 1, 0
        %v1592 = vsel %vm1528, 1, 0
        %v1593 = vsel %vm1529, 1, 0
        %v1594 = vsel %vm1530, 1, 0
        %v1595 = vsel %vm1531, 1, 0
        %v1596 = vsel %vm1532, 1, 0
        %v1597 = vsel %vm1533, 1, 0
        %v1598 = vsel %vm1534, 1, 0
        %v1599 = vsel %vm1535, 1, 0
        %v1600 = vsel %vm1536, 1, 0
        %v1601 = vsel %vm1537, 1, 0
        %v1602 = vsel %vm1538, 1, 0
        %v1603 = vsel %vm1539, 1, 0
        %v1604 = vsel %vm1540, 1, 0
        %v1605 = vsel %vm1541, 1, 0
        %v1606 = vsel %vm1542, 1, 0
        %v1607 = vsel %vm1543, 1, 0
        %v1608 = vsel %vm1544, 1, 0
        %v1609 = vsel %vm1545, 1, 0
        %v1610 = vsel %vm1546, 1, 0
        %v1611 = vsel %vm1547, 1, 0
        %v1612 = vsel %vm1548, 1, 0
        %v1613 = vsel %vm1549, 1, 0
        %v1614 = vsel %vm1550, 1, 0
        %v1615 = vsel %vm1551, 1, 0
        %v1616 = vsel %vm1552, 1, 0
        %v1617 = vsel %vm1553, 1, 0
        %v1618 = vsel %vm1554, 1, 0
        %v1619 = vsel %vm1555, 1, 0
        %v1620 = vsel %vm1556, 1, 0
        %v1621 = vsel %vm1557, 1, 0
        %v1622 = vsel %vm1558, 1, 0
        %v1623 = vsel %vm1559, 1, 0
        %v1624 = vsel %vm1560, 1, 0
        %v1625 = vsel %vm1561, 1, 0
        %v1626 = vsel %vm1562, 1, 0
        %v1627 = vsel %vm1563, 1, 0
        %v1628 = vsel %vm1564, 1, 0
        %v1629 = vsel %vm1565, 1, 0
        %v1630 = vsel %vm1566, 1, 0
        %v1631 = vsel %vm1567, 1, 0
        %v1632 = vsel %vm1568, 1, 0
        %v1633 = vsel %vm1569, 1, 0
        %v1634 = vcvt.s32.f32 %v1570
        %v1635 = vcvt.s32.f32 %v1571
        %v1636 = vcvt.s32.f32 %v1572
        %v1637 = vcvt.s32.f32 %v1573
        %v1638 = vcvt.s32.f32 %v1574
        %v1639 = vcvt.s32.f32 %v1575
        %v1640 = vcvt.s32.f32 %v1576
        %v1641 = vcvt.s32.f32 %v1577
        %v1642 = vcvt.s32.f32 %v1578
        %v1643 = vcvt.s32.f32 %v1579
        %v1644 = vcvt.s32.f32 %v1580
        %v1645 = vcvt.s32.f32 %v1581
        %v1646 = vcvt.s32.f32 %v1582
        %v1647 = vcvt.s32.f32 %v1583
        %v1648 = vcvt.s32.f32 %v1584
        %v1649 = vcvt.s32.f32 %v1585
        %v1650 = vcvt.s32.f32 %v1586
        %v1651 = vcvt.s32.f32 %v1587
        %v1652 = vcvt.s32.f32 %v1588
        %v1653 = vcvt.s32.f32 %v1589
        %v1654 = vcvt.s32.f32 %v1590
        %v1655 = vcvt.s32.f32 %v1591
        %v1656 = vcvt.s32.f32 %v1592
        %v1657 = vcvt.s32.f32 %v1593
        %v1658 = vcvt.s32.f32 %v1594
        %v1659 = vcvt.s32.f32 %v1595
        %v1660 = vcvt.s32.f32 %v1596
        %v1661 = vcvt.s32.f32 %v1597
        %v1662 = vcvt.s32.f32 %v1598
        %v1663 = vcvt.s32.f32 %v1599
        %v1664 = vcvt.s32.f32 %v1600
        %v1665 = vcvt.s32.f32 %v1601
        %v1666 = vcvt.s32.f32 %v1602
        %v1667 = vcvt.s32.f32 %v1603
        %v1668 = vcvt.s32.f32 %v1604
        %v1669 = vcvt.s32.f32 %v1605
        %v1670 = vcvt.s32.f32 %v1606
        %v1671 = vcvt.s32.f32 %v1607
        %v1672 = vcvt.s32.f32 %v1608
        %v1673 = vcvt.s32.f32 %v1609
        %v1674 = vcvt.s32.f32 %v1610
        %v1675 = vcvt.s32.f32 %v1611
        %v1676 = vcvt.s32.f32 %v1612
        %v1677 = vcvt.s32.f32 %v1613
        %v1678 = vcvt.s32.f32 %v1614
        %v1679 = vcvt.s32.f32 %v1615
        %v1680 = vcvt.s32.f32 %v1616
        %v1681 = vcvt.s32.f32 %v1617
        %v1682 = vcvt.s32.f32 %v1618
        %v1683 = vcvt.s32.f32 %v1619
        %v1684 = vcvt.s32.f32 %v1620
        %v1685 = vcvt.s32.f32 %v1621
        %v1686 = vcvt.s32.f32 %v1622
        %v1687 = vcvt.s32.f32 %v1623
        %v1688 = vcvt.s32.f32 %v1624
        %v1689 = vcvt.s32.f32 %v1625
        %v1690 = vcvt.s32.f32 %v1626
        %v1691 = vcvt.s32.f32 %v1627
        %v1692 = vcvt.s32.f32 %v1628
        %v1693 = vcvt.s32.f32 %v1629
        %v1694 = vcvt.s32.f32 %v1630
        %v1695 = vcvt.s32.f32 %v1631
        %v1696 = vcvt.s32.f32 %v1632
        %v1697 = vcvt.s32.f32 %v1633
        %v1699 = vsel %vm796, %v1497, 0
        %1701 = vmatpush.msra.mxu0 0.0
        %1702 = vmatpush.msra.mxu0 0.0
        %1703 = vmatpush.msra.mxu0 0.0
        %1704 = vmatpush.msra.mxu0 0.0
        %1705 = vmatpush.msra.mxu0 0.0
        %1706 = vmatpush.msra.mxu0 0.0
        %1707 = vmatpush.msra.mxu0 0.0
        %1708 = vmatpush.msra.mxu0 0.0
        %1709 = vmatpush.msra.mxu0 %v1690
        %1710 = vmatpush.msra.mxu0 %v1682
        %1711 = vmatpush.msra.mxu0 %v1674
        %1712 = vmatpush.msra.mxu0 %v1666
        %1713 = vmatpush.msra.mxu0 %v1658
        %1714 = vmatpush.msra.mxu0 %v1650
        %1715 = vmatpush.msra.mxu0 %v1642
        %1716 = vmatpush.msra.mxu0 %v1634
        %1717 = vmatmul.f32.gmra.mxu0 %v1699
        %v1718 = vpop.f32.mrf.mxu0
        %v1719 = vadd.f32 0.0, %v1718
        %1720 = vdwg.mxu0
        %1721 = vmatpush.msra.mxu0 0.0
        %1722 = vmatpush.msra.mxu0 0.0
        %1723 = vmatpush.msra.mxu0 0.0
        %1724 = vmatpush.msra.mxu0 0.0
        %1725 = vmatpush.msra.mxu0 0.0
        %1726 = vmatpush.msra.mxu0 0.0
        %1727 = vmatpush.msra.mxu0 0.0
        %1728 = vmatpush.msra.mxu0 0.0
        %1729 = vmatpush.msra.mxu0 %v1691
        %1730 = vmatpush.msra.mxu0 %v1683
        %1731 = vmatpush.msra.mxu0 %v1675
        %1732 = vmatpush.msra.mxu0 %v1667
        %1733 = vmatpush.msra.mxu0 %v1659
        %1734 = vmatpush.msra.mxu0 %v1651
        %1735 = vmatpush.msra.mxu0 %v1643
        %1736 = vmatpush.msra.mxu0 %v1635
        %1737 = vmatmul.f32.gmra.mxu0 %v1699
        %v1738 = vpop.f32.mrf.mxu0
        %v1739 = vadd.f32 0.0, %v1738
        %1740 = vdwg.mxu0
        %1741 = vmatpush.msra.mxu0 0.0
        %1742 = vmatpush.msra.mxu0 0.0
        %1743 = vmatpush.msra.mxu0 0.0
        %1744 = vmatpush.msra.mxu0 0.0
        %1745 = vmatpush.msra.mxu0 0.0
        %1746 = vmatpush.msra.mxu0 0.0
        %1747 = vmatpush.msra.mxu0 0.0
        %1748 = vmatpush.msra.mxu0 0.0
        %1749 = vmatpush.msra.mxu0 %v1692
        %1750 = vmatpush.msra.mxu0 %v1684
        %1751 = vmatpush.msra.mxu0 %v1676
        %1752 = vmatpush.msra.mxu0 %v1668
        %1753 = vmatpush.msra.mxu0 %v1660
        %1754 = vmatpush.msra.mxu0 %v1652
        %1755 = vmatpush.msra.mxu0 %v1644
        %1756 = vmatpush.msra.mxu0 %v1636
        %1757 = vmatmul.f32.gmra.mxu0 %v1699
        %v1758 = vpop.f32.mrf.mxu0
        %v1759 = vadd.f32 0.0, %v1758
        %1760 = vdwg.mxu0
        %1761 = vmatpush.msra.mxu0 0.0
        %1762 = vmatpush.msra.mxu0 0.0
        %1763 = vmatpush.msra.mxu0 0.0
        %1764 = vmatpush.msra.mxu0 0.0
        %1765 = vmatpush.msra.mxu0 0.0
        %1766 = vmatpush.msra.mxu0 0.0
        %1767 = vmatpush.msra.mxu0 0.0
        %1768 = vmatpush.msra.mxu0 0.0
        %1769 = vmatpush.msra.mxu0 %v1693
        %1770 = vmatpush.msra.mxu0 %v1685
        %1771 = vmatpush.msra.mxu0 %v1677
        %1772 = vmatpush.msra.mxu0 %v1669
        %1773 = vmatpush.msra.mxu0 %v1661
        %1774 = vmatpush.msra.mxu0 %v1653
        %1775 = vmatpush.msra.mxu0 %v1645
        %1776 = vmatpush.msra.mxu0 %v1637
        %1777 = vmatmul.f32.gmra.mxu0 %v1699
        %v1778 = vpop.f32.mrf.mxu0
        %v1779 = vadd.f32 0.0, %v1778
        %1780 = vdwg.mxu0
        %1781 = vmatpush.msra.mxu0 0.0
        %1782 = vmatpush.msra.mxu0 0.0
        %1783 = vmatpush.msra.mxu0 0.0
        %1784 = vmatpush.msra.mxu0 0.0
        %1785 = vmatpush.msra.mxu0 0.0
        %1786 = vmatpush.msra.mxu0 0.0
        %1787 = vmatpush.msra.mxu0 0.0
        %1788 = vmatpush.msra.mxu0 0.0
        %1789 = vmatpush.msra.mxu0 %v1694
        %1790 = vmatpush.msra.mxu0 %v1686
        %1791 = vmatpush.msra.mxu0 %v1678
        %1792 = vmatpush.msra.mxu0 %v1670
        %1793 = vmatpush.msra.mxu0 %v1662
        %1794 = vmatpush.msra.mxu0 %v1654
        %1795 = vmatpush.msra.mxu0 %v1646
        %1796 = vmatpush.msra.mxu0 %v1638
        %1797 = vmatmul.f32.gmra.mxu0 %v1699
        %v1798 = vpop.f32.mrf.mxu0
        %v1799 = vadd.f32 0.0, %v1798
        %1800 = vdwg.mxu0
        %1801 = vmatpush.msra.mxu0 0.0
        %1802 = vmatpush.msra.mxu0 0.0
        %1803 = vmatpush.msra.mxu0 0.0
        %1804 = vmatpush.msra.mxu0 0.0
        %1805 = vmatpush.msra.mxu0 0.0
        %1806 = vmatpush.msra.mxu0 0.0
        %1807 = vmatpush.msra.mxu0 0.0
        %1808 = vmatpush.msra.mxu0 0.0
        %1809 = vmatpush.msra.mxu0 %v1695
        %1810 = vmatpush.msra.mxu0 %v1687
        %1811 = vmatpush.msra.mxu0 %v1679
        %1812 = vmatpush.msra.mxu0 %v1671
        %1813 = vmatpush.msra.mxu0 %v1663
        %1814 = vmatpush.msra.mxu0 %v1655
        %1815 = vmatpush.msra.mxu0 %v1647
        %1816 = vmatpush.msra.mxu0 %v1639
        %1817 = vmatmul.f32.gmra.mxu0 %v1699
        %v1818 = vpop.f32.mrf.mxu0
        %v1819 = vadd.f32 0.0, %v1818
        %1820 = vdwg.mxu0
        %1821 = vmatpush.msra.mxu0 0.0
        %1822 = vmatpush.msra.mxu0 0.0
        %1823 = vmatpush.msra.mxu0 0.0
        %1824 = vmatpush.msra.mxu0 0.0
        %1825 = vmatpush.msra.mxu0 0.0
        %1826 = vmatpush.msra.mxu0 0.0
        %1827 = vmatpush.msra.mxu0 0.0
        %1828 = vmatpush.msra.mxu0 0.0
        %1829 = vmatpush.msra.mxu0 %v1696
        %1830 = vmatpush.msra.mxu0 %v1688
        %1831 = vmatpush.msra.mxu0 %v1680
        %1832 = vmatpush.msra.mxu0 %v1672
        %1833 = vmatpush.msra.mxu0 %v1664
        %1834 = vmatpush.msra.mxu0 %v1656
        %1835 = vmatpush.msra.mxu0 %v1648
        %1836 = vmatpush.msra.mxu0 %v1640
        %1837 = vmatmul.f32.gmra.mxu0 %v1699
        %v1838 = vpop.f32.mrf.mxu0
        %v1839 = vadd.f32 0.0, %v1838
        %1840 = vdwg.mxu0
        %1841 = vmatpush.msra.mxu0 0.0
        %1842 = vmatpush.msra.mxu0 0.0
        %1843 = vmatpush.msra.mxu0 0.0
        %1844 = vmatpush.msra.mxu0 0.0
        %1845 = vmatpush.msra.mxu0 0.0
        %1846 = vmatpush.msra.mxu0 0.0
        %1847 = vmatpush.msra.mxu0 0.0
        %1848 = vmatpush.msra.mxu0 0.0
        %1849 = vmatpush.msra.mxu0 %v1697
        %1850 = vmatpush.msra.mxu0 %v1689
        %1851 = vmatpush.msra.mxu0 %v1681
        %1852 = vmatpush.msra.mxu0 %v1673
        %1853 = vmatpush.msra.mxu0 %v1665
        %1854 = vmatpush.msra.mxu0 %v1657
        %1855 = vmatpush.msra.mxu0 %v1649
        %1856 = vmatpush.msra.mxu0 %v1641
        %1857 = vmatmul.f32.gmra.mxu0 %v1699
        %v1858 = vpop.f32.mrf.mxu0
        %v1859 = vadd.f32 0.0, %v1858
        %1860 = vdwg.mxu0
        %v1861 = vadd.f32 %v1488, %v1719
        %v1862 = vadd.f32 %v1489, %v1739
        %v1863 = vadd.f32 %v1490, %v1759
        %v1864 = vadd.f32 %v1491, %v1779
        %v1865 = vadd.f32 %v1492, %v1799
        %v1866 = vadd.f32 %v1493, %v1819
        %v1867 = vadd.f32 %v1494, %v1839
        %v1868 = vadd.f32 %v1495, %v1859
        %s1869 = scalar_lea.vmem [#allocation2], 32
        %v1870 = vld [vmem:[%s1869] sm:$0xff]
        %v1871 = vperm.slane %v376, 4
        %v1872 = vperm.slane %v377, 4
        %v1873 = vperm.slane %v378, 4
        %v1874 = vperm.slane %v379, 4
        %v1875 = vperm.slane %v380, 4
        %v1876 = vperm.slane %v381, 4
        %v1877 = vperm.slane %v382, 4
        %v1878 = vperm.slane %v383, 4
        %vm1879 = vcmp.eq.s32.totalorder %v385, %v1871
        %vm1880 = vcmp.eq.s32.totalorder %v385, %v1872
        %vm1881 = vcmp.eq.s32.totalorder %v385, %v1873
        %vm1882 = vcmp.eq.s32.totalorder %v385, %v1874
        %vm1883 = vcmp.eq.s32.totalorder %v385, %v1875
        %vm1884 = vcmp.eq.s32.totalorder %v385, %v1876
        %vm1885 = vcmp.eq.s32.totalorder %v385, %v1877
        %vm1886 = vcmp.eq.s32.totalorder %v385, %v1878
        %vm1887 = vcmp.eq.s32.totalorder %v386, %v1871
        %vm1888 = vcmp.eq.s32.totalorder %v386, %v1872
        %vm1889 = vcmp.eq.s32.totalorder %v386, %v1873
        %vm1890 = vcmp.eq.s32.totalorder %v386, %v1874
        %vm1891 = vcmp.eq.s32.totalorder %v386, %v1875
        %vm1892 = vcmp.eq.s32.totalorder %v386, %v1876
        %vm1893 = vcmp.eq.s32.totalorder %v386, %v1877
        %vm1894 = vcmp.eq.s32.totalorder %v386, %v1878
        %vm1895 = vcmp.eq.s32.totalorder %v387, %v1871
        %vm1896 = vcmp.eq.s32.totalorder %v387, %v1872
        %vm1897 = vcmp.eq.s32.totalorder %v387, %v1873
        %vm1898 = vcmp.eq.s32.totalorder %v387, %v1874
        %vm1899 = vcmp.eq.s32.totalorder %v387, %v1875
        %vm1900 = vcmp.eq.s32.totalorder %v387, %v1876
        %vm1901 = vcmp.eq.s32.totalorder %v387, %v1877
        %vm1902 = vcmp.eq.s32.totalorder %v387, %v1878
        %vm1903 = vcmp.eq.s32.totalorder %v388, %v1871
        %vm1904 = vcmp.eq.s32.totalorder %v388, %v1872
        %vm1905 = vcmp.eq.s32.totalorder %v388, %v1873
        %vm1906 = vcmp.eq.s32.totalorder %v388, %v1874
        %vm1907 = vcmp.eq.s32.totalorder %v388, %v1875
        %vm1908 = vcmp.eq.s32.totalorder %v388, %v1876
        %vm1909 = vcmp.eq.s32.totalorder %v388, %v1877
        %vm1910 = vcmp.eq.s32.totalorder %v388, %v1878
        %vm1911 = vcmp.eq.s32.totalorder %v389, %v1871
        %vm1912 = vcmp.eq.s32.totalorder %v389, %v1872
        %vm1913 = vcmp.eq.s32.totalorder %v389, %v1873
        %vm1914 = vcmp.eq.s32.totalorder %v389, %v1874
        %vm1915 = vcmp.eq.s32.totalorder %v389, %v1875
        %vm1916 = vcmp.eq.s32.totalorder %v389, %v1876
        %vm1917 = vcmp.eq.s32.totalorder %v389, %v1877
        %vm1918 = vcmp.eq.s32.totalorder %v389, %v1878
        %vm1919 = vcmp.eq.s32.totalorder %v390, %v1871
        %vm1920 = vcmp.eq.s32.totalorder %v390, %v1872
        %vm1921 = vcmp.eq.s32.totalorder %v390, %v1873
        %vm1922 = vcmp.eq.s32.totalorder %v390, %v1874
        %vm1923 = vcmp.eq.s32.totalorder %v390, %v1875
        %vm1924 = vcmp.eq.s32.totalorder %v390, %v1876
        %vm1925 = vcmp.eq.s32.totalorder %v390, %v1877
        %vm1926 = vcmp.eq.s32.totalorder %v390, %v1878
        %vm1927 = vcmp.eq.s32.totalorder %v391, %v1871
        %vm1928 = vcmp.eq.s32.totalorder %v391, %v1872
        %vm1929 = vcmp.eq.s32.totalorder %v391, %v1873
        %vm1930 = vcmp.eq.s32.totalorder %v391, %v1874
        %vm1931 = vcmp.eq.s32.totalorder %v391, %v1875
        %vm1932 = vcmp.eq.s32.totalorder %v391, %v1876
        %vm1933 = vcmp.eq.s32.totalorder %v391, %v1877
        %vm1934 = vcmp.eq.s32.totalorder %v391, %v1878
        %vm1935 = vcmp.eq.s32.totalorder %v392, %v1871
        %vm1936 = vcmp.eq.s32.totalorder %v392, %v1872
        %vm1937 = vcmp.eq.s32.totalorder %v392, %v1873
        %vm1938 = vcmp.eq.s32.totalorder %v392, %v1874
        %vm1939 = vcmp.eq.s32.totalorder %v392, %v1875
        %vm1940 = vcmp.eq.s32.totalorder %v392, %v1876
        %vm1941 = vcmp.eq.s32.totalorder %v392, %v1877
        %vm1942 = vcmp.eq.s32.totalorder %v392, %v1878
        %v1943 = vsel %vm1879, 1, 0
        %v1944 = vsel %vm1880, 1, 0
        %v1945 = vsel %vm1881, 1, 0
        %v1946 = vsel %vm1882, 1, 0
        %v1947 = vsel %vm1883, 1, 0
        %v1948 = vsel %vm1884, 1, 0
        %v1949 = vsel %vm1885, 1, 0
        %v1950 = vsel %vm1886, 1, 0
        %v1951 = vsel %vm1887, 1, 0
        %v1952 = vsel %vm1888, 1, 0
        %v1953 = vsel %vm1889, 1, 0
        %v1954 = vsel %vm1890, 1, 0
        %v1955 = vsel %vm1891, 1, 0
        %v1956 = vsel %vm1892, 1, 0
        %v1957 = vsel %vm1893, 1, 0
        %v1958 = vsel %vm1894, 1, 0
        %v1959 = vsel %vm1895, 1, 0
        %v1960 = vsel %vm1896, 1, 0
        %v1961 = vsel %vm1897, 1, 0
        %v1962 = vsel %vm1898, 1, 0
        %v1963 = vsel %vm1899, 1, 0
        %v1964 = vsel %vm1900, 1, 0
        %v1965 = vsel %vm1901, 1, 0
        %v1966 = vsel %vm1902, 1, 0
        %v1967 = vsel %vm1903, 1, 0
        %v1968 = vsel %vm1904, 1, 0
        %v1969 = vsel %vm1905, 1, 0
        %v1970 = vsel %vm1906, 1, 0
        %v1971 = vsel %vm1907, 1, 0
        %v1972 = vsel %vm1908, 1, 0
        %v1973 = vsel %vm1909, 1, 0
        %v1974 = vsel %vm1910, 1, 0
        %v1975 = vsel %vm1911, 1, 0
        %v1976 = vsel %vm1912, 1, 0
        %v1977 = vsel %vm1913, 1, 0
        %v1978 = vsel %vm1914, 1, 0
        %v1979 = vsel %vm1915, 1, 0
        %v1980 = vsel %vm1916, 1, 0
        %v1981 = vsel %vm1917, 1, 0
        %v1982 = vsel %vm1918, 1, 0
        %v1983 = vsel %vm1919, 1, 0
        %v1984 = vsel %vm1920, 1, 0
        %v1985 = vsel %vm1921, 1, 0
        %v1986 = vsel %vm1922, 1, 0
        %v1987 = vsel %vm1923, 1, 0
        %v1988 = vsel %vm1924, 1, 0
        %v1989 = vsel %vm1925, 1, 0
        %v1990 = vsel %vm1926, 1, 0
        %v1991 = vsel %vm1927, 1, 0
        %v1992 = vsel %vm1928, 1, 0
        %v1993 = vsel %vm1929, 1, 0
        %v1994 = vsel %vm1930, 1, 0
        %v1995 = vsel %vm1931, 1, 0
        %v1996 = vsel %vm1932, 1, 0
        %v1997 = vsel %vm1933, 1, 0
        %v1998 = vsel %vm1934, 1, 0
        %v1999 = vsel %vm1935, 1, 0
        %v2000 = vsel %vm1936, 1, 0
        %v2001 = vsel %vm1937, 1, 0
        %v2002 = vsel %vm1938, 1, 0
        %v2003 = vsel %vm1939, 1, 0
        %v2004 = vsel %vm1940, 1, 0
        %v2005 = vsel %vm1941, 1, 0
        %v2006 = vsel %vm1942, 1, 0
        %v2007 = vcvt.s32.f32 %v1943
        %v2008 = vcvt.s32.f32 %v1944
        %v2009 = vcvt.s32.f32 %v1945
        %v2010 = vcvt.s32.f32 %v1946
        %v2011 = vcvt.s32.f32 %v1947
        %v2012 = vcvt.s32.f32 %v1948
        %v2013 = vcvt.s32.f32 %v1949
        %v2014 = vcvt.s32.f32 %v1950
        %v2015 = vcvt.s32.f32 %v1951
        %v2016 = vcvt.s32.f32 %v1952
        %v2017 = vcvt.s32.f32 %v1953
        %v2018 = vcvt.s32.f32 %v1954
        %v2019 = vcvt.s32.f32 %v1955
        %v2020 = vcvt.s32.f32 %v1956
        %v2021 = vcvt.s32.f32 %v1957
        %v2022 = vcvt.s32.f32 %v1958
        %v2023 = vcvt.s32.f32 %v1959
        %v2024 = vcvt.s32.f32 %v1960
        %v2025 = vcvt.s32.f32 %v1961
        %v2026 = vcvt.s32.f32 %v1962
        %v2027 = vcvt.s32.f32 %v1963
        %v2028 = vcvt.s32.f32 %v1964
        %v2029 = vcvt.s32.f32 %v1965
        %v2030 = vcvt.s32.f32 %v1966
        %v2031 = vcvt.s32.f32 %v1967
        %v2032 = vcvt.s32.f32 %v1968
        %v2033 = vcvt.s32.f32 %v1969
        %v2034 = vcvt.s32.f32 %v1970
        %v2035 = vcvt.s32.f32 %v1971
        %v2036 = vcvt.s32.f32 %v1972
        %v2037 = vcvt.s32.f32 %v1973
        %v2038 = vcvt.s32.f32 %v1974
        %v2039 = vcvt.s32.f32 %v1975
        %v2040 = vcvt.s32.f32 %v1976
        %v2041 = vcvt.s32.f32 %v1977
        %v2042 = vcvt.s32.f32 %v1978
        %v2043 = vcvt.s32.f32 %v1979
        %v2044 = vcvt.s32.f32 %v1980
        %v2045 = vcvt.s32.f32 %v1981
        %v2046 = vcvt.s32.f32 %v1982
        %v2047 = vcvt.s32.f32 %v1983
        %v2048 = vcvt.s32.f32 %v1984
        %v2049 = vcvt.s32.f32 %v1985
        %v2050 = vcvt.s32.f32 %v1986
        %v2051 = vcvt.s32.f32 %v1987
        %v2052 = vcvt.s32.f32 %v1988
        %v2053 = vcvt.s32.f32 %v1989
        %v2054 = vcvt.s32.f32 %v1990
        %v2055 = vcvt.s32.f32 %v1991
        %v2056 = vcvt.s32.f32 %v1992
        %v2057 = vcvt.s32.f32 %v1993
        %v2058 = vcvt.s32.f32 %v1994
        %v2059 = vcvt.s32.f32 %v1995
        %v2060 = vcvt.s32.f32 %v1996
        %v2061 = vcvt.s32.f32 %v1997
        %v2062 = vcvt.s32.f32 %v1998
        %v2063 = vcvt.s32.f32 %v1999
        %v2064 = vcvt.s32.f32 %v2000
        %v2065 = vcvt.s32.f32 %v2001
        %v2066 = vcvt.s32.f32 %v2002
        %v2067 = vcvt.s32.f32 %v2003
        %v2068 = vcvt.s32.f32 %v2004
        %v2069 = vcvt.s32.f32 %v2005
        %v2070 = vcvt.s32.f32 %v2006
        %v2072 = vsel %vm796, %v1870, 0
        %2074 = vmatpush.msra.mxu0 0.0
        %2075 = vmatpush.msra.mxu0 0.0
        %2076 = vmatpush.msra.mxu0 0.0
        %2077 = vmatpush.msra.mxu0 0.0
        %2078 = vmatpush.msra.mxu0 0.0
        %2079 = vmatpush.msra.mxu0 0.0
        %2080 = vmatpush.msra.mxu0 0.0
        %2081 = vmatpush.msra.mxu0 0.0
        %2082 = vmatpush.msra.mxu0 %v2063
        %2083 = vmatpush.msra.mxu0 %v2055
        %2084 = vmatpush.msra.mxu0 %v2047
        %2085 = vmatpush.msra.mxu0 %v2039
        %2086 = vmatpush.msra.mxu0 %v2031
        %2087 = vmatpush.msra.mxu0 %v2023
        %2088 = vmatpush.msra.mxu0 %v2015
        %2089 = vmatpush.msra.mxu0 %v2007
        %2090 = vmatmul.f32.gmra.mxu0 %v2072
        %v2091 = vpop.f32.mrf.mxu0
        %v2092 = vadd.f32 0.0, %v2091
        %2093 = vdwg.mxu0
        %2094 = vmatpush.msra.mxu0 0.0
        %2095 = vmatpush.msra.mxu0 0.0
        %2096 = vmatpush.msra.mxu0 0.0
        %2097 = vmatpush.msra.mxu0 0.0
        %2098 = vmatpush.msra.mxu0 0.0
        %2099 = vmatpush.msra.mxu0 0.0
        %2100 = vmatpush.msra.mxu0 0.0
        %2101 = vmatpush.msra.mxu0 0.0
        %2102 = vmatpush.msra.mxu0 %v2064
        %2103 = vmatpush.msra.mxu0 %v2056
        %2104 = vmatpush.msra.mxu0 %v2048
        %2105 = vmatpush.msra.mxu0 %v2040
        %2106 = vmatpush.msra.mxu0 %v2032
        %2107 = vmatpush.msra.mxu0 %v2024
        %2108 = vmatpush.msra.mxu0 %v2016
        %2109 = vmatpush.msra.mxu0 %v2008
        %2110 = vmatmul.f32.gmra.mxu0 %v2072
        %v2111 = vpop.f32.mrf.mxu0
        %v2112 = vadd.f32 0.0, %v2111
        %2113 = vdwg.mxu0
        %2114 = vmatpush.msra.mxu0 0.0
        %2115 = vmatpush.msra.mxu0 0.0
        %2116 = vmatpush.msra.mxu0 0.0
        %2117 = vmatpush.msra.mxu0 0.0
        %2118 = vmatpush.msra.mxu0 0.0
        %2119 = vmatpush.msra.mxu0 0.0
        %2120 = vmatpush.msra.mxu0 0.0
        %2121 = vmatpush.msra.mxu0 0.0
        %2122 = vmatpush.msra.mxu0 %v2065
        %2123 = vmatpush.msra.mxu0 %v2057
        %2124 = vmatpush.msra.mxu0 %v2049
        %2125 = vmatpush.msra.mxu0 %v2041
        %2126 = vmatpush.msra.mxu0 %v2033
        %2127 = vmatpush.msra.mxu0 %v2025
        %2128 = vmatpush.msra.mxu0 %v2017
        %2129 = vmatpush.msra.mxu0 %v2009
        %2130 = vmatmul.f32.gmra.mxu0 %v2072
        %v2131 = vpop.f32.mrf.mxu0
        %v2132 = vadd.f32 0.0, %v2131
        %2133 = vdwg.mxu0
        %2134 = vmatpush.msra.mxu0 0.0
        %2135 = vmatpush.msra.mxu0 0.0
        %2136 = vmatpush.msra.mxu0 0.0
        %2137 = vmatpush.msra.mxu0 0.0
        %2138 = vmatpush.msra.mxu0 0.0
        %2139 = vmatpush.msra.mxu0 0.0
        %2140 = vmatpush.msra.mxu0 0.0
        %2141 = vmatpush.msra.mxu0 0.0
        %2142 = vmatpush.msra.mxu0 %v2066
        %2143 = vmatpush.msra.mxu0 %v2058
        %2144 = vmatpush.msra.mxu0 %v2050
        %2145 = vmatpush.msra.mxu0 %v2042
        %2146 = vmatpush.msra.mxu0 %v2034
        %2147 = vmatpush.msra.mxu0 %v2026
        %2148 = vmatpush.msra.mxu0 %v2018
        %2149 = vmatpush.msra.mxu0 %v2010
        %2150 = vmatmul.f32.gmra.mxu0 %v2072
        %v2151 = vpop.f32.mrf.mxu0
        %v2152 = vadd.f32 0.0, %v2151
        %2153 = vdwg.mxu0
        %2154 = vmatpush.msra.mxu0 0.0
        %2155 = vmatpush.msra.mxu0 0.0
        %2156 = vmatpush.msra.mxu0 0.0
        %2157 = vmatpush.msra.mxu0 0.0
        %2158 = vmatpush.msra.mxu0 0.0
        %2159 = vmatpush.msra.mxu0 0.0
        %2160 = vmatpush.msra.mxu0 0.0
        %2161 = vmatpush.msra.mxu0 0.0
        %2162 = vmatpush.msra.mxu0 %v2067
        %2163 = vmatpush.msra.mxu0 %v2059
        %2164 = vmatpush.msra.mxu0 %v2051
        %2165 = vmatpush.msra.mxu0 %v2043
        %2166 = vmatpush.msra.mxu0 %v2035
        %2167 = vmatpush.msra.mxu0 %v2027
        %2168 = vmatpush.msra.mxu0 %v2019
        %2169 = vmatpush.msra.mxu0 %v2011
        %2170 = vmatmul.f32.gmra.mxu0 %v2072
        %v2171 = vpop.f32.mrf.mxu0
        %v2172 = vadd.f32 0.0, %v2171
        %2173 = vdwg.mxu0
        %2174 = vmatpush.msra.mxu0 0.0
        %2175 = vmatpush.msra.mxu0 0.0
        %2176 = vmatpush.msra.mxu0 0.0
        %2177 = vmatpush.msra.mxu0 0.0
        %2178 = vmatpush.msra.mxu0 0.0
        %2179 = vmatpush.msra.mxu0 0.0
        %2180 = vmatpush.msra.mxu0 0.0
        %2181 = vmatpush.msra.mxu0 0.0
        %2182 = vmatpush.msra.mxu0 %v2068
        %2183 = vmatpush.msra.mxu0 %v2060
        %2184 = vmatpush.msra.mxu0 %v2052
        %2185 = vmatpush.msra.mxu0 %v2044
        %2186 = vmatpush.msra.mxu0 %v2036
        %2187 = vmatpush.msra.mxu0 %v2028
        %2188 = vmatpush.msra.mxu0 %v2020
        %2189 = vmatpush.msra.mxu0 %v2012
        %2190 = vmatmul.f32.gmra.mxu0 %v2072
        %v2191 = vpop.f32.mrf.mxu0
        %v2192 = vadd.f32 0.0, %v2191
        %2193 = vdwg.mxu0
        %2194 = vmatpush.msra.mxu0 0.0
        %2195 = vmatpush.msra.mxu0 0.0
        %2196 = vmatpush.msra.mxu0 0.0
        %2197 = vmatpush.msra.mxu0 0.0
        %2198 = vmatpush.msra.mxu0 0.0
        %2199 = vmatpush.msra.mxu0 0.0
        %2200 = vmatpush.msra.mxu0 0.0
        %2201 = vmatpush.msra.mxu0 0.0
        %2202 = vmatpush.msra.mxu0 %v2069
        %2203 = vmatpush.msra.mxu0 %v2061
        %2204 = vmatpush.msra.mxu0 %v2053
        %2205 = vmatpush.msra.mxu0 %v2045
        %2206 = vmatpush.msra.mxu0 %v2037
        %2207 = vmatpush.msra.mxu0 %v2029
        %2208 = vmatpush.msra.mxu0 %v2021
        %2209 = vmatpush.msra.mxu0 %v2013
        %2210 = vmatmul.f32.gmra.mxu0 %v2072
        %v2211 = vpop.f32.mrf.mxu0
        %v2212 = vadd.f32 0.0, %v2211
        %2213 = vdwg.mxu0
        %2214 = vmatpush.msra.mxu0 0.0
        %2215 = vmatpush.msra.mxu0 0.0
        %2216 = vmatpush.msra.mxu0 0.0
        %2217 = vmatpush.msra.mxu0 0.0
        %2218 = vmatpush.msra.mxu0 0.0
        %2219 = vmatpush.msra.mxu0 0.0
        %2220 = vmatpush.msra.mxu0 0.0
        %2221 = vmatpush.msra.mxu0 0.0
        %2222 = vmatpush.msra.mxu0 %v2070
        %2223 = vmatpush.msra.mxu0 %v2062
        %2224 = vmatpush.msra.mxu0 %v2054
        %2225 = vmatpush.msra.mxu0 %v2046
        %2226 = vmatpush.msra.mxu0 %v2038
        %2227 = vmatpush.msra.mxu0 %v2030
        %2228 = vmatpush.msra.mxu0 %v2022
        %2229 = vmatpush.msra.mxu0 %v2014
        %2230 = vmatmul.f32.gmra.mxu0 %v2072
        %v2231 = vpop.f32.mrf.mxu0
        %v2232 = vadd.f32 0.0, %v2231
        %2233 = vdwg.mxu0
        %v2234 = vadd.f32 %v1861, %v2092
        %v2235 = vadd.f32 %v1862, %v2112
        %v2236 = vadd.f32 %v1863, %v2132
        %v2237 = vadd.f32 %v1864, %v2152
        %v2238 = vadd.f32 %v1865, %v2172
        %v2239 = vadd.f32 %v1866, %v2192
        %v2240 = vadd.f32 %v1867, %v2212
        %v2241 = vadd.f32 %v1868, %v2232
        %2242 = vst [vmem:[%s178] sm:$0xff] %v2234
        %2243 = vst [vmem:[%s178 + $0x8] sm:$0xff] %v2235
        %2244 = vst [vmem:[%s178 + $0x10] sm:$0xff] %v2236
        %2245 = vst [vmem:[%s178 + $0x18] sm:$0xff] %v2237
        %2246 = vst [vmem:[%s178 + $0x20] sm:$0xff] %v2238
        %2247 = vst [vmem:[%s178 + $0x28] sm:$0xff] %v2239
        %2248 = vst [vmem:[%s178 + $0x30] sm:$0xff] %v2240
        %2249 = vst [vmem:[%s178 + $0x38] sm:$0xff] %v2241
        %s2250 = sand.u32 %s94, 1
        %s2251 = scalar_lea.sflag [#allocation4], %s2250
        %s2252 = sand.u32 %s94, 1
        %s2253 = smul.addr %s2252, 64
        %s2254 = scalar_lea.vmem [#allocation5], %s2253
        // Predicated region
        $region37: #{tpu_custom_call.1} parent=31 // pred_check
          %p2255 = pneg %p104
        $region38: #{tpu_custom_call.1} parent=31 // pred_check_branch
          %2257 = sbr.rel (%p2255) target = $region40
        $region39: #{tpu_custom_call.1} parent=31 // pred_region
          %s2258 = smul.u32 8, %s18
          %2260 = vsyncadd %s2251, 0
          %s2261 = smul.addr %s2258, 8
          %s2262 = scalar_lea.hbm %s3, %s2261
          %s2264 = sshll.u32 %s2254, 4
          %s2265 = int_to_ptr.vmem [resolvable:$true] %s2264
          %s2266 = sshll.u32 %s2262, 4
          %s2267 = int_to_ptr.hbm [resolvable:$true] %s2266
          %2269 = dma.vmem_to_hbm [thread:$0]  %s2265, 1024, %s2267, %s2251
        $region40: #{tpu_custom_call.1} parent=31 // pred_fallthru
          _
      $region32: #{tpu_custom_call.1} parent=5 // pred_fallthru
        _
      %p2270 = scmp.le.s32.totalorder 2, %s13
      // Predicated region
      $region41: #{tpu_custom_call.1} parent=5 // pred_check
        %p2271 = pneg %p2270
      $region42: #{tpu_custom_call.1} parent=5 // pred_check_branch
        %2273 = sbr.rel (%p2271) target = $region44
      $region43: #{tpu_custom_call.1} parent=5 // pred_region
        %s2274 = ssub.s32 %s13, 2
        // Predicated region
        $region45: #{tpu_custom_call.1} parent=43 // pred_check
          %p2275 = pneg %p110
        $region46: #{tpu_custom_call.1} parent=43 // pred_check_branch
          %2277 = sbr.rel (%p2275) target = $region48
        $region47: #{tpu_custom_call.1} parent=43 // pred_region
          %s2278 = sand.u32 %s95, 1
          %s2279 = scalar_lea.sflag [#allocation4], %s2278
          %s2280 = sand.u32 %s95, 1
          %s2281 = smul.addr %s2280, 64
          %s2282 = scalar_lea.vmem [#allocation5], %s2281
          %2284 = dma.done %s2279, 1024
        $region48: #{tpu_custom_call.1} parent=43 // pred_fallthru
          _
      $region44: #{tpu_custom_call.1} parent=5 // pred_fallthru
        _
    $region6: #{tpu_custom_call.1} parent=1 // loop_footer
      %s17 = sadd.s32 1, %s13
    $region7: #{tpu_custom_call.1} parent=1 // loop_footer_branch
      %12 = sbr.rel target = $region3
    $region8: #{tpu_custom_call.1} parent=1 // loop_exit
      _
    %2285 = vsyncpa [#allocation3], 1
    %s2286 = scalar_lea.sflag [#allocation3], 1
    %2287 = vsyncpa %s2286, 1
    %2288 = vsyncpa [#allocation4], 1
    %s2289 = scalar_lea.sflag [#allocation4], 1
    %2290 = vsyncpa %s2289, 1

</llo_original>
